<compile_context>
chip_gen: v6e
topology: v6e:2x2x1
jax: 0.10.0
libtpu: 0.0.40
codegen_flags: <defaults>
</compile_context>

<pallas_src>
import numpy as np
import jax
import jax.numpy as jnp
from jax.experimental import pallas as pl
from jax.experimental.pallas import tpu as pltpu

PAD = 128  # lane padding for all feature dimensions


def _silu(x):
    # divide-free SiLU: x * sigmoid(x) == 0.5 * x * (tanh(0.5*x) + 1)
    return 0.5 * x * (jnp.tanh(0.5 * x) + 1.0)


# ---------------------------------------------------------------------------
# fused node-encoder kernel (+ hoisted phi_e node projections ha / hb)
#   x = where(is_ligand, where(ligand_mask, atom_enc(f), fg_enc(f)),
#             residue_enc(f)) + sigma_embed(sigma)
#   ha = x @ wea ;  hb = x @ web + be1     (phi_e first layer, hoisted)
# mats: 0 wa1, 1 wa2, 2 wf1, 3 wf2, 4 wr1, 5 wr2, 6 ws2, 7 wea, 8 web
# rows: 0 ba1, 1 ba2, 2 bf1, 3 bf2, 4 br1, 5 br2, 6 ws1, 7 bs1, 8 bs2, 9 be1
# ---------------------------------------------------------------------------
def _encoder_kernel(tflag_ref, feat_ref, flg_ref, mats_ref, rows_ref,
                    h_ref, ha_ref, hb_ref):
    i = pl.program_id(0)
    tf = tflag_ref[i]                       # bit0: has ligand, bit1: has protein
    cdt = ha_ref.dtype

    feat = feat_ref[...].astype(cdt)        # (T, 128)
    is_lig = flg_ref[:, 0:1]                # (T, 1)
    lmask = flg_ref[:, 1:2]
    sig = flg_ref[:, 2:3]

    def mlp(x, w1, b1, w2, b2):
        hh = _silu(jnp.dot(x, mats_ref[w1], preferred_element_type=jnp.float32)
                   + rows_ref[b1:b1 + 1, :])
        return (jnp.dot(hh.astype(cdt), mats_ref[w2],
                        preferred_element_type=jnp.float32)
                + rows_ref[b2:b2 + 1, :])

    # sigma_embed first layer is Linear(1, 4F): a broadcast multiply, no MXU.
    hs = _silu(sig * rows_ref[6:7, :] + rows_ref[7:8, :])
    h_ref[...] = (jnp.dot(hs.astype(cdt), mats_ref[6],
                          preferred_element_type=jnp.float32)
                  + rows_ref[8:9, :]).astype(h_ref.dtype)

    @pl.when((tf & 1) == 1)                 # tile contains ligand nodes
    def _():
        atom = mlp(feat, 0, 0, 1, 1)
        fg = mlp(feat, 2, 2, 3, 3)
        h_ref[...] += (is_lig * (lmask * atom + (1.0 - lmask) * fg)).astype(h_ref.dtype)

    @pl.when((tf & 2) == 2)                 # tile contains protein nodes
    def _():
        res = mlp(feat, 4, 4, 5, 5)
        h_ref[...] += ((1.0 - is_lig) * res).astype(h_ref.dtype)

    # hoisted phi_e node-side projections (be1 folded into hb)
    h = h_ref[...].astype(cdt)
    ha_ref[...] = jnp.dot(h, mats_ref[7],
                          preferred_element_type=jnp.float32).astype(cdt)
    hb_ref[...] = (jnp.dot(h, mats_ref[8], preferred_element_type=jnp.float32)
                   + rows_ref[9:10, :]).astype(cdt)


def encode_nodes(feat, flags, tflag, params, tile):
    npad = feat.shape[0]
    ni = npad // tile
    cdt = params["compute_dtype"]
    node = lambda i, tf: (i, 0)
    gs = pltpu.PrefetchScalarGridSpec(
        num_scalar_prefetch=1,
        grid=(ni,),
        in_specs=[pl.BlockSpec((tile, PAD), node),
                  pl.BlockSpec((tile, PAD), node),
                  pl.BlockSpec(params["enc_mats"].shape, lambda i, tf: (0, 0, 0)),
                  pl.BlockSpec(params["enc_rows"].shape, lambda i, tf: (0, 0))],
        out_specs=(pl.BlockSpec((tile, PAD), node),
                   pl.BlockSpec((tile, PAD), node),
                   pl.BlockSpec((tile, PAD), node)),
    )
    return pl.pallas_call(
        _encoder_kernel,
        grid_spec=gs,
        out_shape=(jax.ShapeDtypeStruct((npad, PAD), jnp.float32),
                   jax.ShapeDtypeStruct((npad, PAD), cdt),
                   jax.ShapeDtypeStruct((npad, PAD), cdt)),
        compiler_params=pltpu.CompilerParams(dimension_semantics=("parallel",)),
    )(tflag, feat, flags, params["enc_mats"], params["enc_rows"])


# ---------------------------------------------------------------------------
# tiled EGNN + fused adjacency + fused atom_decoder + velocity parametrization
#   aux columns: 0 batch, 1 is_protein, 2 valid, 3 update_coords_mask
# mats: 0 we2, 1 wx1, 2 wh1a, 3 wh1b, 4 wh2, 5 wd1, 6 wd2
# rows: 0 wd, 1 be2, 2 bx1, 3 wx2, 4 bh1, 5 bh2, 6 bd1, 7 bd2
# ---------------------------------------------------------------------------
def _make_egnn_kernel(cl2, cp2, cc2):
    def kernel(jmap_ref, jcnt_ref,
               h_ref, ha_ref, hb_ref, pos_i_ref, pos_j_ref, aux_i_ref, aux_j_ref,
               wm_ref, wr_ref,
               dec_ref, pvel_ref,
               agg_acc, pos_acc):
        i = pl.program_id(0)
        jj = pl.program_id(1)
        ti = ha_ref.shape[0]
        tj = hb_ref.shape[0]
        cdt = ha_ref.dtype

        @pl.when(jj == 0)
        def _init():
            agg_acc[...] = jnp.zeros_like(agg_acc)
            pos_acc[...] = jnp.zeros_like(pos_acc)

        # grid-compressed j axis: only overlapping tiles are real; padded steps
        # repeat the previous block index (no DMA) and are skipped here.
        @pl.when(jj < jcnt_ref[i])
        def _edge_block():
            ha_i = ha_ref[...]               # (ti, 128) cdt
            hb_j = hb_ref[...]               # (tj, 128) cdt
            pos_i = pos_i_ref[...]           # (ti, 128) f32, xyz in lanes 0..2
            pos_j = pos_j_ref[...]
            aux_i = aux_i_ref[...]
            aux_j = aux_j_ref[...]

            # ---- pairwise geometry, per-edge (ti, tj, .) layout throughout ----
            diff = pos_i[:, None, :] - pos_j[None, :, :]           # (ti, tj, 128)
            d2e = jnp.sum(diff * diff, axis=-1, keepdims=True)     # (ti, tj, 1)

            # fused get_edges: per-pair effective squared cutoff is built
            # lane-dense (tile^2 scalars, cheap) and broadcast once into the
            # per-edge layout; adjacency / gate never change layout after that.
            bi = aux_i[:, 0:1]
            bjT = aux_j[:, 0:1].T
            pri = aux_i[:, 1:2]
            prjT = aux_j[:, 1:2].T
            vi = aux_i[:, 2:3]
            vjT = aux_j[:, 2:3].T
            both_p = pri * prjT
            both_l = (1.0 - pri) * (1.0 - prjT)
            cut2 = cc2 + both_p * (cp2 - cc2) + both_l * (cl2 - cc2)  # (ti, tj)
            ok = (jnp.abs(bi - bjT) < 0.5) & (vi * vjT > 0.5)
            cut_eff = jnp.where(ok, cut2, -1.0)                       # (ti, tj)
            adj_e = (d2e < cut_eff[:, :, None]).astype(jnp.float32)   # (ti, tj, 1)

            # ---- phi_e: per-edge slabs in compute dtype (bf16 on v6e/v7x) ----
            wd_row = wr_ref[0:1, :].astype(cdt)
            pre = (ha_i[:, None, :] + hb_j[None, :, :]
                   + d2e.astype(cdt) * wd_row)                        # (ti, tj, 128)
            m1 = _silu(pre).reshape(ti * tj, PAD)
            m2 = jnp.dot(m1, wm_ref[0], preferred_element_type=jnp.float32)
            m = _silu(m2.astype(cdt) + wr_ref[1:2, :].astype(cdt))
            m3 = m.reshape(ti, tj, PAD) * adj_e.astype(cdt)           # masked messages

            # ---- phi_x coordinate gate: lane reduce, stays per-edge ----
            cx = _silu(jnp.dot(m3.reshape(ti * tj, PAD), wm_ref[1],
                               preferred_element_type=jnp.float32).astype(cdt)
                       + wr_ref[2:3, :].astype(cdt))
            gate = jnp.sum(cx * wr_ref[3:4, :].astype(cdt),
                           axis=-1, keepdims=True)                    # (ti*tj, 1)
            w3 = gate.astype(jnp.float32).reshape(ti, tj, 1) * adj_e  # (ti, tj, 1)

            # ---- accumulate over the j axis (f32) ----
            agg_acc[...] += jnp.sum(m3.astype(jnp.float32), axis=1)
            pos_acc[...] += jnp.sum(w3 * diff, axis=1)

        @pl.when(jj == pl.num_programs(1) - 1)
        def _finalize():
            h_i = h_ref[...].astype(cdt)
            agg = agg_acc[...]
            # phi_h with the concat split into two matmuls (bf16 operands)
            nh = _silu(jnp.dot(h_i, wm_ref[2], preferred_element_type=jnp.float32)
                       + jnp.dot(agg.astype(cdt), wm_ref[3],
                                 preferred_element_type=jnp.float32)
                       + wr_ref[4:5, :])
            hout = (jnp.dot(nh.astype(cdt), wm_ref[4],
                            preferred_element_type=jnp.float32) + wr_ref[5:6, :])
            # fused atom_decoder
            dh = _silu(jnp.dot(hout.astype(cdt), wm_ref[5],
                               preferred_element_type=jnp.float32) + wr_ref[6:7, :])
            dec_ref[...] = (jnp.dot(dh.astype(cdt), wm_ref[6],
                                    preferred_element_type=jnp.float32)
                            + wr_ref[7:8, :]).astype(dec_ref.dtype)
            # velocity parametrization fused: egnn_pos_out - pos == upd * pos_agg
            pvel_ref[...] = (aux_i_ref[:, 3:4] * pos_acc[...]).astype(pvel_ref.dtype)

    return kernel


def egnn_decode(h, ha, hb, pos, aux, jmap, jcount, nj_max, params, edge_cutoff, tile):
    npad = h.shape[0]
    ni = npad // tile
    cl, cp, cc = edge_cutoff
    cl2 = 1e30 if cl is None else float(cl) ** 2
    cp2 = 1e30 if cp is None else float(cp) ** 2
    cc2 = 1e30 if cc is None else float(cc) ** 2

    row_i = lambda i, jj, jm, jc: (i, 0)
    row_j = lambda i, jj, jm, jc: (jm[i * nj_max + jj], 0)
    cmat = lambda i, jj, jm, jc: (0, 0, 0)
    crow = lambda i, jj, jm, jc: (0, 0)

    grid_spec = pltpu.PrefetchScalarGridSpec(
        num_scalar_prefetch=2,
        grid=(ni, nj_max),
        in_specs=[pl.BlockSpec((tile, PAD), row_i),   # h   (finalize)
                  pl.BlockSpec((tile, PAD), row_i),   # ha  (hoisted h@wea)
                  pl.BlockSpec((tile, PAD), row_j),   # hb  (hoisted h@web + be1)
                  pl.BlockSpec((tile, PAD), row_i),   # pos_i
                  pl.BlockSpec((tile, PAD), row_j),   # pos_j
                  pl.BlockSpec((tile, PAD), row_i),   # aux_i
                  pl.BlockSpec((tile, PAD), row_j),   # aux_j
                  pl.BlockSpec(params["egnn_mats"].shape, cmat),
                  pl.BlockSpec(params["egnn_rows"].shape, crow)],
        out_specs=(pl.BlockSpec((tile, PAD), row_i),
                   pl.BlockSpec((tile, PAD), row_i)),
        scratch_shapes=[pltpu.VMEM((tile, PAD), jnp.float32),   # agg accumulator
                        pltpu.VMEM((tile, PAD), jnp.float32)],  # pos accumulator
    )
    dec, pvel = pl.pallas_call(
        _make_egnn_kernel(cl2, cp2, cc2),
        grid_spec=grid_spec,
        out_shape=(jax.ShapeDtypeStruct((npad, PAD), jnp.float32),
                   jax.ShapeDtypeStruct((npad, PAD), jnp.float32)),
        compiler_params=pltpu.CompilerParams(
            dimension_semantics=("parallel", "arbitrary"),
            vmem_limit_bytes=32 * 1024 * 1024),
    )(jmap, jcount, h, ha, hb, pos, pos, aux, aux,
      params["egnn_mats"], params["egnn_rows"])
    return dec, pvel


# ---------------------------------------------------------------------------
# parameters (deterministic synthetic weights, padded to 128 lanes, stacked)
# ---------------------------------------------------------------------------
def _pad2(w):
    out = jnp.zeros((PAD, PAD), jnp.float32)
    return out.at[:w.shape[0], :w.shape[1]].set(w)


def _padrow(b):
    b = jnp.asarray(b, jnp.float32).reshape(1, -1)
    return jnp.zeros((1, PAD), jnp.float32).at[:, :b.shape[1]].set(b)


def _linear(key, fi, fo, scale=0.1):
    kw, kb = jax.random.split(key)
    return (jax.random.normal(kw, (fi, fo), jnp.float32) * scale,
            jax.random.normal(kb, (fo,), jnp.float32) * scale)


def init_params(key, ligand_features, protein_features, joint_features,
                hidden_features, compute_dtype=jnp.bfloat16):
    # compute_dtype=bfloat16 targets v6e/v7x; pass jnp.float32 for v5e
    LF, PF, JF, HF = ligand_features, protein_features, joint_features, hidden_features
    assert max(2 * LF, 2 * PF, 4 * JF, JF, HF) <= PAD
    ks = iter(jax.random.split(key, 20))

    wa1, ba1 = _linear(next(ks), LF, 2 * LF); wa2, ba2 = _linear(next(ks), 2 * LF, JF)
    wf1, bf1 = _linear(next(ks), LF, 2 * LF); wf2, bf2 = _linear(next(ks), 2 * LF, JF)
    wr1, br1 = _linear(next(ks), PF, 2 * PF); wr2, br2 = _linear(next(ks), 2 * PF, JF)
    ws1, bs1 = _linear(next(ks), 1, 4 * JF);  ws2, bs2 = _linear(next(ks), 4 * JF, JF)
    wd1, bd1 = _linear(next(ks), JF, 2 * LF); wd2, bd2 = _linear(next(ks), 2 * LF, LF)

    we1, be1 = _linear(next(ks), 2 * JF + 1, HF)   # phi_e first Linear([h_i,h_j,d2])
    we2, be2 = _linear(next(ks), HF, HF)
    wx1, bx1 = _linear(next(ks), HF, HF)
    wx2, _ = _linear(next(ks), HF, 1)              # bias-free final coord gate
    wh1, bh1 = _linear(next(ks), JF + HF, HF)      # phi_h first Linear([h, agg])
    wh2, bh2 = _linear(next(ks), HF, JF)

    enc_mats = jnp.stack([_pad2(w) for w in
                          (wa1, wa2, wf1, wf2, wr1, wr2, ws2,
                           we1[:JF], we1[JF:2 * JF])]).astype(compute_dtype)
    enc_rows = jnp.concatenate([_padrow(b) for b in
                                (ba1, ba2, bf1, bf2, br1, br2,
                                 ws1.reshape(-1), bs1, bs2, be1)], axis=0)
    egnn_mats = jnp.stack([_pad2(w) for w in
                           (we2, wx1, wh1[:JF], wh1[JF:], wh2, wd1, wd2)]
                          ).astype(compute_dtype)
    egnn_rows = jnp.concatenate([_padrow(b) for b in
                                 (we1[2 * JF], be2, bx1, wx2.reshape(-1),
                                  bh1, bh2, bd1, bd2)], axis=0)
    return dict(dims=dict(LF=LF, PF=PF, JF=JF, HF=HF),
                compute_dtype=compute_dtype,
                enc_mats=enc_mats, enc_rows=enc_rows,
                egnn_mats=egnn_mats, egnn_rows=egnn_rows)


# ---------------------------------------------------------------------------
# forward pass (mirrors ConsistencyEstimatorModel.forward, EGNN branch,
#               egnn_velocity_parametrization=True)
# ---------------------------------------------------------------------------
def consistency_estimator_forward(params, x_ligand, x_protein,
                                  pos_ligand, pos_protein,
                                  batch_ligand, batch_protein,
                                  sigma, ligand_mask,
                                  edge_cutoff=(None, None, None), tile=64):
    # tile must be a multiple of 16 and <= 64 (VMEM-safe on v7x's 64 MiB).
    assert tile % 16 == 0 and tile <= 64
    LF = params["dims"]["LF"]
    f32 = jnp.float32
    n_lig = x_ligand.shape[0]
    n_prot = x_protein.shape[0]
    n = n_lig + n_prot
    npad = ((n + tile - 1) // tile) * tile
    ni = npad // tile

    lmask_f = ligand_mask.astype(f32)
    batch = jnp.concatenate([batch_ligand, batch_protein]).astype(jnp.int32)
    sig_node = sigma.reshape(-1)[batch].astype(f32)

    # ---- fused node encoder inputs ----
    feat = jnp.zeros((npad, PAD), f32)
    feat = feat.at[:n_lig, :x_ligand.shape[1]].set(x_ligand.astype(f32))
    feat = feat.at[n_lig:n, :x_protein.shape[1]].set(x_protein.astype(f32))
    flags = jnp.zeros((npad, PAD), f32)
    flags = flags.at[:n_lig, 0].set(1.0)                     # is_ligand
    flags = flags.at[:n_lig, 1].set(lmask_f)                 # atom vs fg select
    flags = flags.at[:n, 2].set(sig_node)                    # sigma per node

    # per-tile class flags (ligand / protein / mixed) -- node layout is static.
    tflag_np = np.zeros((ni,), np.int32)
    for t in range(ni):
        lo, hi = t * tile, (t + 1) * tile
        if lo < n_lig:
            tflag_np[t] |= 1
        if max(lo, n_lig) < min(hi, n):
            tflag_np[t] |= 2
    tflag = jnp.asarray(tflag_np)

    h, ha, hb = encode_nodes(feat, flags, tflag, params, tile)   # (npad, 128)

    # ---- EGNN node-side inputs ----
    pos = jnp.zeros((npad, PAD), f32)
    pos = pos.at[:n_lig, :3].set(pos_ligand.astype(f32))
    pos = pos.at[n_lig:n, :3].set(pos_protein.astype(f32))
    aux = jnp.zeros((npad, PAD), f32)
    aux = aux.at[:n, 0].set(batch.astype(f32))               # batch id
    aux = aux.at[n_lig:n, 1].set(1.0)                        # is_protein
    aux = aux.at[:n, 2].set(1.0)                             # valid (not padding)
    aux = aux.at[:n_lig, 3].set(lmask_f)                     # update_coords_mask

    # ---- grid compression: per-row-tile list of overlapping column tiles ----
    # TODO(synk): needs concrete batch ids (host side); under jit this wrapper
    #             would have to fall back to the full (ni, ni) grid.
    batch_np = np.asarray(batch)
    big = 2 ** 30
    bmin_np = np.full((npad,), big, np.int64)
    bmax_np = np.full((npad,), -big, np.int64)
    bmin_np[:n] = batch_np
    bmax_np[:n] = batch_np
    bmin_np = bmin_np.reshape(ni, tile).min(axis=1)
    bmax_np = bmax_np.reshape(ni, tile).max(axis=1)
    overlap = (bmin_np[:, None] <= bmax_np[None, :]) & (bmin_np[None, :] <= bmax_np[:, None])
    counts = overlap.sum(axis=1).astype(np.int32)
    nj_max = max(1, int(counts.max()))
    jmap_np = np.zeros((ni, nj_max), np.int32)
    for t in range(ni):
        idx = np.nonzero(overlap[t])[0].astype(np.int32)
        if len(idx) == 0:
            idx = np.array([t], np.int32)
        pad_len = nj_max - min(len(idx), nj_max)
        jmap_np[t] = np.concatenate([idx[:nj_max], np.full(pad_len, idx[-1], np.int32)])
    jmap = jnp.asarray(jmap_np.reshape(-1))
    jcount = jnp.asarray(counts)

    dec, pvel = egnn_decode(h, ha, hb, pos, aux, jmap, jcount, nj_max,
                            params, edge_cutoff, tile)

    # velocity parametrization is fused in-kernel; NaN reset matches the torch
    # semantics (zero the whole tensor if any element is NaN).
    pos_vel = pvel[:n, :3]
    pos_vel = jnp.where(jnp.any(jnp.isnan(pos_vel)), jnp.zeros_like(pos_vel), pos_vel)

    x_final_ligand = dec[:n_lig, :LF]
    pos_out_ligand = pos_vel[:n_lig]
    # TODO(synk): boolean-mask selection is dynamic-shape (same as torch); done
    #             in plain JAX outside the kernels and outside jit.
    return x_final_ligand[ligand_mask], pos_out_ligand[ligand_mask]


# ---------------------------------------------------------------------------
# demo
# ---------------------------------------------------------------------------
if __name__ == "__main__":
    LIGAND_F, PROTEIN_F = 8, 10
    JOINT_F, HIDDEN_F = 16, 32
    N_LIG, N_PROT, BATCH = 12, 20, 2
    EDGE_CUTOFF = (4.0, 4.0, 4.0)
    TILE = 16            # exercises a 2x2 edge grid on the 32 padded nodes

    key = jax.random.PRNGKey(0)
    k_par, k_xl, k_xp, k_pl, k_pp, k_sig = jax.random.split(key, 6)

    params = init_params(k_par, LIGAND_F, PROTEIN_F, JOINT_F, HIDDEN_F,
                         compute_dtype=jnp.bfloat16)

    x_ligand = jax.random.normal(k_xl, (N_LIG, LIGAND_F), jnp.float32)
    x_protein = jax.random.normal(k_xp, (N_PROT, PROTEIN_F), jnp.float32)
    pos_ligand = jax.random.normal(k_pl, (N_LIG, 3), jnp.float32) * 2.0
    pos_protein = jax.random.normal(k_pp, (N_PROT, 3), jnp.float32) * 2.0
    batch_ligand = jnp.repeat(jnp.arange(BATCH, dtype=jnp.int32), N_LIG // BATCH)
    batch_protein = jnp.repeat(jnp.arange(BATCH, dtype=jnp.int32), N_PROT // BATCH)
    sigma = jax.random.uniform(k_sig, (BATCH, 1), jnp.float32)
    ligand_mask = (jnp.arange(N_LIG) % 3) != 0

    x_out, pos_out = consistency_estimator_forward(
        params, x_ligand, x_protein, pos_ligand, pos_protein,
        batch_ligand, batch_protein, sigma, ligand_mask,
        edge_cutoff=EDGE_CUTOFF, tile=TILE)

    jax.block_until_ready((x_out, pos_out))
    assert x_out.shape == (int(ligand_mask.sum()), LIGAND_F)
    assert pos_out.shape == (int(ligand_mask.sum()), 3)
    assert bool(jnp.all(jnp.isfinite(x_out))) and bool(jnp.all(jnp.isfinite(pos_out)))
    print("KERNEL_OK")
</pallas_src>

<mosaic_0001>
module attributes {stable_mosaic.version = 11 : i64} {
  func.func @_encoder_kernel(%arg0: i32, %arg1: memref<2xi32, #tpu.memory_space<smem>>, %arg2: memref<16x128xf32, #tpu.memory_space<vmem>>, %arg3: memref<16x128xf32, #tpu.memory_space<vmem>>, %arg4: memref<9x128x128xbf16, #tpu.memory_space<vmem>>, %arg5: memref<10x128xf32, #tpu.memory_space<vmem>>, %arg6: memref<16x128xf32, #tpu.memory_space<vmem>>, %arg7: memref<16x128xbf16, #tpu.memory_space<vmem>>, %arg8: memref<16x128xbf16, #tpu.memory_space<vmem>>) attributes {dimension_semantics = [#tpu.dimension_semantics<parallel>], iteration_bounds = array<i64: 2>, scalar_prefetch = 1 : i64, scratch_operands = 0 : i64, tpu.core_type = #tpu.core_type<tc>, window_params = [{transform_indices = @transform_0, window_bounds = array<i64: 16, 128>}, {transform_indices = @transform_1, window_bounds = array<i64: 16, 128>}, {pipeline_mode = #tpu.pipeline_mode<synchronous>, transform_indices = @transform_2, window_bounds = array<i64: 9, 128, 128>}, {pipeline_mode = #tpu.pipeline_mode<synchronous>, transform_indices = @transform_3, window_bounds = array<i64: 10, 128>}, {transform_indices = @transform_4, window_bounds = array<i64: 16, 128>}, {transform_indices = @transform_5, window_bounds = array<i64: 16, 128>}, {transform_indices = @transform_6, window_bounds = array<i64: 16, 128>}]} {
    %0 = arith.index_cast %arg0 : i32 to index
    %1 = memref.load %arg1[%0] : memref<2xi32, #tpu.memory_space<smem>>
    %c0 = arith.constant 0 : index
    %c0_0 = arith.constant 0 : index
    %2 = vector.load %arg2[%c0, %c0_0] : memref<16x128xf32, #tpu.memory_space<vmem>>, vector<16x128xf32>
    %3 = arith.truncf %2 : vector<16x128xf32> to vector<16x128xbf16>
    %c0_1 = arith.constant 0 : index
    %c0_2 = arith.constant 0 : index
    %4 = vector.load %arg3[%c0_1, %c0_2] : memref<16x128xf32, #tpu.memory_space<vmem>>, vector<16x1xf32>
    %c0_3 = arith.constant 0 : index
    %c1 = arith.constant 1 : index
    %5 = vector.load %arg3[%c0_3, %c1] : memref<16x128xf32, #tpu.memory_space<vmem>>, vector<16x1xf32>
    %c0_4 = arith.constant 0 : index
    %c2 = arith.constant 2 : index
    %6 = vector.load %arg3[%c0_4, %c2] : memref<16x128xf32, #tpu.memory_space<vmem>>, vector<16x1xf32>
    %c6 = arith.constant 6 : index
    %c0_5 = arith.constant 0 : index
    %7 = vector.load %arg5[%c6, %c0_5] : memref<10x128xf32, #tpu.memory_space<vmem>>, vector<1x128xf32>
    %8 = vector.broadcast %6 : vector<16x1xf32> to vector<16x128xf32>
    %9 = vector.broadcast %7 : vector<1x128xf32> to vector<16x128xf32>
    %10 = arith.mulf %8, %9 : vector<16x128xf32>
    %c7 = arith.constant 7 : index
    %c0_6 = arith.constant 0 : index
    %11 = vector.load %arg5[%c7, %c0_6] : memref<10x128xf32, #tpu.memory_space<vmem>>, vector<1x128xf32>
    %12 = vector.broadcast %11 : vector<1x128xf32> to vector<16x128xf32>
    %13 = arith.addf %10, %12 : vector<16x128xf32>
    %cst = arith.constant 5.000000e-01 : f32
    %14 = vector.broadcast %cst : f32 to vector<16x128xf32>
    %15 = arith.mulf %14, %13 : vector<16x128xf32>
    %cst_7 = arith.constant 5.000000e-01 : f32
    %16 = vector.broadcast %cst_7 : f32 to vector<16x128xf32>
    %17 = arith.mulf %16, %13 : vector<16x128xf32>
    %18 = math.tanh %17 : vector<16x128xf32>
    %cst_8 = arith.constant 1.000000e+00 : f32
    %19 = vector.broadcast %cst_8 : f32 to vector<16x128xf32>
    %20 = arith.addf %18, %19 : vector<16x128xf32>
    %21 = arith.mulf %15, %20 : vector<16x128xf32>
    %22 = arith.truncf %21 : vector<16x128xf32> to vector<16x128xbf16>
    %c6_9 = arith.constant 6 : index
    %c0_10 = arith.constant 0 : index
    %c0_11 = arith.constant 0 : index
    %23 = vector.load %arg4[%c6_9, %c0_10, %c0_11] : memref<9x128x128xbf16, #tpu.memory_space<vmem>>, vector<1x128x128xbf16>
    %24 = vector.shape_cast %23 : vector<1x128x128xbf16> to vector<128x128xbf16>
    %cst_12 = arith.constant dense<0.000000e+00> : vector<16x128xf32>
    %25 = tpu.matmul %22, %24, %cst_12 {dimension_numbers = #tpu.dot_dimension_numbers<[1], [0], [0], [1], [0, 0, 1, 1], [], []>} : vector<16x128xbf16>, vector<128x128xbf16>, vector<16x128xf32> -> vector<16x128xf32>
    %c8 = arith.constant 8 : index
    %c0_13 = arith.constant 0 : index
    %26 = vector.load %arg5[%c8, %c0_13] : memref<10x128xf32, #tpu.memory_space<vmem>>, vector<1x128xf32>
    %27 = vector.broadcast %26 : vector<1x128xf32> to vector<16x128xf32>
    %28 = arith.addf %25, %27 : vector<16x128xf32>
    %c0_14 = arith.constant 0 : index
    %c0_15 = arith.constant 0 : index
    %29 = vector.load %arg6[%c0_14, %c0_15] : memref<16x128xf32, #tpu.memory_space<vmem>>, vector<16x128xf32>
    tpu.vector_store %arg6[%c0_14, %c0_15], %28 {strides = array<i32>} : memref<16x128xf32, #tpu.memory_space<vmem>>, vector<16x128xf32>,
    %c1_i32 = arith.constant 1 : i32
    %30 = arith.andi %1, %c1_i32 : i32
    %c1_i32_16 = arith.constant 1 : i32
    %31 = arith.cmpi eq, %30, %c1_i32_16 : i32
    %32 = arith.extui %31 : i1 to i32
    %c0_i32 = arith.constant 0 : i32
    %33 = arith.cmpi ne, %32, %c0_i32 : i32
    scf.if %33 {
      %c0_34 = arith.constant 0 : index
      %c0_35 = arith.constant 0 : index
      %c0_36 = arith.constant 0 : index
      %53 = vector.load %arg4[%c0_34, %c0_35, %c0_36] : memref<9x128x128xbf16, #tpu.memory_space<vmem>>, vector<1x128x128xbf16>
      %54 = vector.shape_cast %53 : vector<1x128x128xbf16> to vector<128x128xbf16>
      %cst_37 = arith.constant dense<0.000000e+00> : vector<16x128xf32>
      %55 = tpu.matmul %3, %54, %cst_37 {dimension_numbers = #tpu.dot_dimension_numbers<[1], [0], [0], [1], [0, 0, 1, 1], [], []>} : vector<16x128xbf16>, vector<128x128xbf16>, vector<16x128xf32> -> vector<16x128xf32>
      %c0_38 = arith.constant 0 : index
      %c0_39 = arith.constant 0 : index
      %56 = vector.load %arg5[%c0_38, %c0_39] : memref<10x128xf32, #tpu.memory_space<vmem>>, vector<1x128xf32>
      %57 = vector.broadcast %56 : vector<1x128xf32> to vector<16x128xf32>
      %58 = arith.addf %55, %57 : vector<16x128xf32>
      %cst_40 = arith.constant 5.000000e-01 : f32
      %59 = vector.broadcast %cst_40 : f32 to vector<16x128xf32>
      %60 = arith.mulf %59, %58 : vector<16x128xf32>
      %cst_41 = arith.constant 5.000000e-01 : f32
      %61 = vector.broadcast %cst_41 : f32 to vector<16x128xf32>
      %62 = arith.mulf %61, %58 : vector<16x128xf32>
      %63 = math.tanh %62 : vector<16x128xf32>
      %cst_42 = arith.constant 1.000000e+00 : f32
      %64 = vector.broadcast %cst_42 : f32 to vector<16x128xf32>
      %65 = arith.addf %63, %64 : vector<16x128xf32>
      %66 = arith.mulf %60, %65 : vector<16x128xf32>
      %67 = arith.truncf %66 : vector<16x128xf32> to vector<16x128xbf16>
      %c1_43 = arith.constant 1 : index
      %c0_44 = arith.constant 0 : index
      %c0_45 = arith.constant 0 : index
      %68 = vector.load %arg4[%c1_43, %c0_44, %c0_45] : memref<9x128x128xbf16, #tpu.memory_space<vmem>>, vector<1x128x128xbf16>
      %69 = vector.shape_cast %68 : vector<1x128x128xbf16> to vector<128x128xbf16>
      %cst_46 = arith.constant dense<0.000000e+00> : vector<16x128xf32>
      %70 = tpu.matmul %67, %69, %cst_46 {dimension_numbers = #tpu.dot_dimension_numbers<[1], [0], [0], [1], [0, 0, 1, 1], [], []>} : vector<16x128xbf16>, vector<128x128xbf16>, vector<16x128xf32> -> vector<16x128xf32>
      %c1_47 = arith.constant 1 : index
      %c0_48 = arith.constant 0 : index
      %71 = vector.load %arg5[%c1_47, %c0_48] : memref<10x128xf32, #tpu.memory_space<vmem>>, vector<1x128xf32>
      %72 = vector.broadcast %71 : vector<1x128xf32> to vector<16x128xf32>
      %73 = arith.addf %70, %72 : vector<16x128xf32>
      %c2_49 = arith.constant 2 : index
      %c0_50 = arith.constant 0 : index
      %c0_51 = arith.constant 0 : index
      %74 = vector.load %arg4[%c2_49, %c0_50, %c0_51] : memref<9x128x128xbf16, #tpu.memory_space<vmem>>, vector<1x128x128xbf16>
      %75 = vector.shape_cast %74 : vector<1x128x128xbf16> to vector<128x128xbf16>
      %cst_52 = arith.constant dense<0.000000e+00> : vector<16x128xf32>
      %76 = tpu.matmul %3, %75, %cst_52 {dimension_numbers = #tpu.dot_dimension_numbers<[1], [0], [0], [1], [0, 0, 1, 1], [], []>} : vector<16x128xbf16>, vector<128x128xbf16>, vector<16x128xf32> -> vector<16x128xf32>
      %c2_53 = arith.constant 2 : index
      %c0_54 = arith.constant 0 : index
      %77 = vector.load %arg5[%c2_53, %c0_54] : memref<10x128xf32, #tpu.memory_space<vmem>>, vector<1x128xf32>
      %78 = vector.broadcast %77 : vector<1x128xf32> to vector<16x128xf32>
      %79 = arith.addf %76, %78 : vector<16x128xf32>
      %cst_55 = arith.constant 5.000000e-01 : f32
      %80 = vector.broadcast %cst_55 : f32 to vector<16x128xf32>
      %81 = arith.mulf %80, %79 : vector<16x128xf32>
      %cst_56 = arith.constant 5.000000e-01 : f32
      %82 = vector.broadcast %cst_56 : f32 to vector<16x128xf32>
      %83 = arith.mulf %82, %79 : vector<16x128xf32>
      %84 = math.tanh %83 : vector<16x128xf32>
      %cst_57 = arith.constant 1.000000e+00 : f32
      %85 = vector.broadcast %cst_57 : f32 to vector<16x128xf32>
      %86 = arith.addf %84, %85 : vector<16x128xf32>
      %87 = arith.mulf %81, %86 : vector<16x128xf32>
      %88 = arith.truncf %87 : vector<16x128xf32> to vector<16x128xbf16>
      %c3 = arith.constant 3 : index
      %c0_58 = arith.constant 0 : index
      %c0_59 = arith.constant 0 : index
      %89 = vector.load %arg4[%c3, %c0_58, %c0_59] : memref<9x128x128xbf16, #tpu.memory_space<vmem>>, vector<1x128x128xbf16>
      %90 = vector.shape_cast %89 : vector<1x128x128xbf16> to vector<128x128xbf16>
      %cst_60 = arith.constant dense<0.000000e+00> : vector<16x128xf32>
      %91 = tpu.matmul %88, %90, %cst_60 {dimension_numbers = #tpu.dot_dimension_numbers<[1], [0], [0], [1], [0, 0, 1, 1], [], []>} : vector<16x128xbf16>, vector<128x128xbf16>, vector<16x128xf32> -> vector<16x128xf32>
      %c3_61 = arith.constant 3 : index
      %c0_62 = arith.constant 0 : index
      %92 = vector.load %arg5[%c3_61, %c0_62] : memref<10x128xf32, #tpu.memory_space<vmem>>, vector<1x128xf32>
      %93 = vector.broadcast %92 : vector<1x128xf32> to vector<16x128xf32>
      %94 = arith.addf %91, %93 : vector<16x128xf32>
      %c0_63 = arith.constant 0 : index
      %c0_64 = arith.constant 0 : index
      %95 = vector.load %arg6[%c0_63, %c0_64] : memref<16x128xf32, #tpu.memory_space<vmem>>, vector<16x128xf32>
      %96 = vector.broadcast %5 : vector<16x1xf32> to vector<16x128xf32>
      %97 = arith.mulf %96, %73 : vector<16x128xf32>
      %cst_65 = arith.constant 1.000000e+00 : f32
      %98 = vector.broadcast %cst_65 : f32 to vector<16x1xf32>
      %99 = arith.subf %98, %5 : vector<16x1xf32>
      %100 = vector.broadcast %99 : vector<16x1xf32> to vector<16x128xf32>
      %101 = arith.mulf %100, %94 : vector<16x128xf32>
      %102 = arith.addf %97, %101 : vector<16x128xf32>
      %103 = vector.broadcast %4 : vector<16x1xf32> to vector<16x128xf32>
      %104 = arith.mulf %103, %102 : vector<16x128xf32>
      %105 = arith.addf %95, %104 : vector<16x128xf32>
      %c0_66 = arith.constant 0 : index
      %c0_67 = arith.constant 0 : index
      %106 = vector.load %arg6[%c0_66, %c0_67] : memref<16x128xf32, #tpu.memory_space<vmem>>, vector<16x128xf32>
      tpu.vector_store %arg6[%c0_66, %c0_67], %105 {strides = array<i32>} : memref<16x128xf32, #tpu.memory_space<vmem>>, vector<16x128xf32>,
    } else {
    }
    %c2_i32 = arith.constant 2 : i32
    %34 = arith.andi %1, %c2_i32 : i32
    %c2_i32_17 = arith.constant 2 : i32
    %35 = arith.cmpi eq, %34, %c2_i32_17 : i32
    %36 = arith.extui %35 : i1 to i32
    %c0_i32_18 = arith.constant 0 : i32
    %37 = arith.cmpi ne, %36, %c0_i32_18 : i32
    scf.if %37 {
      %c4 = arith.constant 4 : index
      %c0_34 = arith.constant 0 : index
      %c0_35 = arith.constant 0 : index
      %53 = vector.load %arg4[%c4, %c0_34, %c0_35] : memref<9x128x128xbf16, #tpu.memory_space<vmem>>, vector<1x128x128xbf16>
      %54 = vector.shape_cast %53 : vector<1x128x128xbf16> to vector<128x128xbf16>
      %cst_36 = arith.constant dense<0.000000e+00> : vector<16x128xf32>
      %55 = tpu.matmul %3, %54, %cst_36 {dimension_numbers = #tpu.dot_dimension_numbers<[1], [0], [0], [1], [0, 0, 1, 1], [], []>} : vector<16x128xbf16>, vector<128x128xbf16>, vector<16x128xf32> -> vector<16x128xf32>
      %c4_37 = arith.constant 4 : index
      %c0_38 = arith.constant 0 : index
      %56 = vector.load %arg5[%c4_37, %c0_38] : memref<10x128xf32, #tpu.memory_space<vmem>>, vector<1x128xf32>
      %57 = vector.broadcast %56 : vector<1x128xf32> to vector<16x128xf32>
      %58 = arith.addf %55, %57 : vector<16x128xf32>
      %cst_39 = arith.constant 5.000000e-01 : f32
      %59 = vector.broadcast %cst_39 : f32 to vector<16x128xf32>
      %60 = arith.mulf %59, %58 : vector<16x128xf32>
      %cst_40 = arith.constant 5.000000e-01 : f32
      %61 = vector.broadcast %cst_40 : f32 to vector<16x128xf32>
      %62 = arith.mulf %61, %58 : vector<16x128xf32>
      %63 = math.tanh %62 : vector<16x128xf32>
      %cst_41 = arith.constant 1.000000e+00 : f32
      %64 = vector.broadcast %cst_41 : f32 to vector<16x128xf32>
      %65 = arith.addf %63, %64 : vector<16x128xf32>
      %66 = arith.mulf %60, %65 : vector<16x128xf32>
      %67 = arith.truncf %66 : vector<16x128xf32> to vector<16x128xbf16>
      %c5 = arith.constant 5 : index
      %c0_42 = arith.constant 0 : index
      %c0_43 = arith.constant 0 : index
      %68 = vector.load %arg4[%c5, %c0_42, %c0_43] : memref<9x128x128xbf16, #tpu.memory_space<vmem>>, vector<1x128x128xbf16>
      %69 = vector.shape_cast %68 : vector<1x128x128xbf16> to vector<128x128xbf16>
      %cst_44 = arith.constant dense<0.000000e+00> : vector<16x128xf32>
      %70 = tpu.matmul %67, %69, %cst_44 {dimension_numbers = #tpu.dot_dimension_numbers<[1], [0], [0], [1], [0, 0, 1, 1], [], []>} : vector<16x128xbf16>, vector<128x128xbf16>, vector<16x128xf32> -> vector<16x128xf32>
      %c5_45 = arith.constant 5 : index
      %c0_46 = arith.constant 0 : index
      %71 = vector.load %arg5[%c5_45, %c0_46] : memref<10x128xf32, #tpu.memory_space<vmem>>, vector<1x128xf32>
      %72 = vector.broadcast %71 : vector<1x128xf32> to vector<16x128xf32>
      %73 = arith.addf %70, %72 : vector<16x128xf32>
      %c0_47 = arith.constant 0 : index
      %c0_48 = arith.constant 0 : index
      %74 = vector.load %arg6[%c0_47, %c0_48] : memref<16x128xf32, #tpu.memory_space<vmem>>, vector<16x128xf32>
      %cst_49 = arith.constant 1.000000e+00 : f32
      %75 = vector.broadcast %cst_49 : f32 to vector<16x1xf32>
      %76 = arith.subf %75, %4 : vector<16x1xf32>
      %77 = vector.broadcast %76 : vector<16x1xf32> to vector<16x128xf32>
      %78 = arith.mulf %77, %73 : vector<16x128xf32>
      %79 = arith.addf %74, %78 : vector<16x128xf32>
      %c0_50 = arith.constant 0 : index
      %c0_51 = arith.constant 0 : index
      %80 = vector.load %arg6[%c0_50, %c0_51] : memref<16x128xf32, #tpu.memory_space<vmem>>, vector<16x128xf32>
      tpu.vector_store %arg6[%c0_50, %c0_51], %79 {strides = array<i32>} : memref<16x128xf32, #tpu.memory_space<vmem>>, vector<16x128xf32>,
    } else {
    }
    %c0_19 = arith.constant 0 : index
    %c0_20 = arith.constant 0 : index
    %38 = vector.load %arg6[%c0_19, %c0_20] : memref<16x128xf32, #tpu.memory_space<vmem>>, vector<16x128xf32>
    %39 = arith.truncf %38 : vector<16x128xf32> to vector<16x128xbf16>
    %c7_21 = arith.constant 7 : index
    %c0_22 = arith.constant 0 : index
    %c0_23 = arith.constant 0 : index
    %40 = vector.load %arg4[%c7_21, %c0_22, %c0_23] : memref<9x128x128xbf16, #tpu.memory_space<vmem>>, vector<1x128x128xbf16>
    %41 = vector.shape_cast %40 : vector<1x128x128xbf16> to vector<128x128xbf16>
    %cst_24 = arith.constant dense<0.000000e+00> : vector<16x128xf32>
    %42 = tpu.matmul %39, %41, %cst_24 {dimension_numbers = #tpu.dot_dimension_numbers<[1], [0], [0], [1], [0, 0, 1, 1], [], []>} : vector<16x128xbf16>, vector<128x128xbf16>, vector<16x128xf32> -> vector<16x128xf32>
    %43 = arith.truncf %42 : vector<16x128xf32> to vector<16x128xbf16>
    %c0_25 = arith.constant 0 : index
    %c0_26 = arith.constant 0 : index
    %44 = vector.load %arg7[%c0_25, %c0_26] : memref<16x128xbf16, #tpu.memory_space<vmem>>, vector<16x128xbf16>
    tpu.vector_store %arg7[%c0_25, %c0_26], %43 {strides = array<i32>} : memref<16x128xbf16, #tpu.memory_space<vmem>>, vector<16x128xbf16>,
    %c8_27 = arith.constant 8 : index
    %c0_28 = arith.constant 0 : index
    %c0_29 = arith.constant 0 : index
    %45 = vector.load %arg4[%c8_27, %c0_28, %c0_29] : memref<9x128x128xbf16, #tpu.memory_space<vmem>>, vector<1x128x128xbf16>
    %46 = vector.shape_cast %45 : vector<1x128x128xbf16> to vector<128x128xbf16>
    %cst_30 = arith.constant dense<0.000000e+00> : vector<16x128xf32>
    %47 = tpu.matmul %39, %46, %cst_30 {dimension_numbers = #tpu.dot_dimension_numbers<[1], [0], [0], [1], [0, 0, 1, 1], [], []>} : vector<16x128xbf16>, vector<128x128xbf16>, vector<16x128xf32> -> vector<16x128xf32>
    %c9 = arith.constant 9 : index
    %c0_31 = arith.constant 0 : index
    %48 = vector.load %arg5[%c9, %c0_31] : memref<10x128xf32, #tpu.memory_space<vmem>>, vector<1x128xf32>
    %49 = vector.broadcast %48 : vector<1x128xf32> to vector<16x128xf32>
    %50 = arith.addf %47, %49 : vector<16x128xf32>
    %51 = arith.truncf %50 : vector<16x128xf32> to vector<16x128xbf16>
    %c0_32 = arith.constant 0 : index
    %c0_33 = arith.constant 0 : index
    %52 = vector.load %arg8[%c0_32, %c0_33] : memref<16x128xbf16, #tpu.memory_space<vmem>>, vector<16x128xbf16>
    tpu.vector_store %arg8[%c0_32, %c0_33], %51 {strides = array<i32>} : memref<16x128xbf16, #tpu.memory_space<vmem>>, vector<16x128xbf16>,
    return
  }
  func.func @transform_0(%arg0: i32, %arg1: memref<2xi32, #tpu.memory_space<smem>>) -> (i32, i32) {
    %c0_i32 = arith.constant 0 : i32
    %c0_i32_0 = arith.constant 0 : i32
    return %arg0, %c0_i32 : i32, i32
  }
  func.func @transform_1(%arg0: i32, %arg1: memref<2xi32, #tpu.memory_space<smem>>) -> (i32, i32) {
    %c0_i32 = arith.constant 0 : i32
    %c0_i32_0 = arith.constant 0 : i32
    return %arg0, %c0_i32 : i32, i32
  }
  func.func @transform_2(%arg0: i32, %arg1: memref<2xi32, #tpu.memory_space<smem>>) -> (i32, i32, i32) {
    %c0_i32 = arith.constant 0 : i32
    %c0_i32_0 = arith.constant 0 : i32
    %c0_i32_1 = arith.constant 0 : i32
    %c0_i32_2 = arith.constant 0 : i32
    return %c0_i32, %c0_i32_0, %c0_i32_1 : i32, i32, i32
  }
  func.func @transform_3(%arg0: i32, %arg1: memref<2xi32, #tpu.memory_space<smem>>) -> (i32, i32) {
    %c0_i32 = arith.constant 0 : i32
    %c0_i32_0 = arith.constant 0 : i32
    %c0_i32_1 = arith.constant 0 : i32
    return %c0_i32, %c0_i32_0 : i32, i32
  }
  func.func @transform_4(%arg0: i32, %arg1: memref<2xi32, #tpu.memory_space<smem>>) -> (i32, i32) {
    %c0_i32 = arith.constant 0 : i32
    %c0_i32_0 = arith.constant 0 : i32
    return %arg0, %c0_i32 : i32, i32
  }
  func.func @transform_5(%arg0: i32, %arg1: memref<2xi32, #tpu.memory_space<smem>>) -> (i32, i32) {
    %c0_i32 = arith.constant 0 : i32
    %c0_i32_0 = arith.constant 0 : i32
    return %arg0, %c0_i32 : i32, i32
  }
  func.func @transform_6(%arg0: i32, %arg1: memref<2xi32, #tpu.memory_space<smem>>) -> (i32, i32) {
    %c0_i32 = arith.constant 0 : i32
    %c0_i32_0 = arith.constant 0 : i32
    return %arg0, %c0_i32 : i32, i32
  }
}

</mosaic_0001>

<llo_original>
// kernel: tpu_custom_call.1
$region0: #{tpu_custom_call.1}
  #allocation0 [shape = 'u32[]', space=smem, size = 0x4, offset = 0x4, fixed_abs, tag = 'smem constant byte address 0x4 - core index']
  #allocation1 [shape = 'u32[144,128]{1,0:T(1,128)}', space=vmem, size = 0x12000, scoped, tag = 'internal scratch']
  #allocation2 [shape = 's32[1]{0}', space=sflag, size = 0x4, scoped, tag = 'scoped memory for tpu_custom_call.1']
  #allocation3 [shape = 'u8[512]{0}', space=smem, size = 0x200, scoped, tag = 'prefetched SMEM operand 0']
  %s0 = inlined_call_operand.hbm [shape: s32[2], index: 0, kind: input, shape index: {}]
  %s1 = inlined_call_operand.hbm [shape: f32[32,128], index: 1, kind: input, shape index: {}]
  %s2 = inlined_call_operand.hbm [shape: f32[32,128], index: 2, kind: input, shape index: {}]
  %s3 = inlined_call_operand.hbm [shape: bf16[9,128,128], index: 3, kind: input, shape index: {}]
  %s4 = inlined_call_operand.hbm [shape: f32[10,128], index: 4, kind: input, shape index: {}]
  %s5 = inlined_call_operand.hbm [shape: f32[32,128], index: 5, kind: output, shape index: {0}]
  %s6 = inlined_call_operand.hbm [shape: bf16[32,128], index: 6, kind: output, shape index: {1}]
  %s7 = inlined_call_operand.hbm [shape: bf16[32,128], index: 7, kind: output, shape index: {2}]
  %8 = xla_tuple %s5, %s6, %s7
  %s9 = sld [smem:[#allocation0]]
  $region89: #{tpu_custom_call.1} parent=0
    _
  %s11 = ssub.s32 1, %s9
  %s12 = scalar_select 0, %s11, %s9
  %14 = dma.hbm_to_smem %s0, 16, [#allocation3], [#allocation2]
  %15 = dma.done [#allocation2], 16
  %16 = sfence
  $region1: #{tpu_custom_call.1} parent=0
    #allocation4 [shape = 'u8[16384]{0}', space=vmem, size = 0x4000, scoped, tag = 'input window, operand 1']
    #allocation5 [shape = 's32[2]{0}', space=sflag, size = 0x8, scoped, tag = 'scoped memory for tpu_custom_call.1']
    #allocation6 [shape = 's32[2]{0}', space=sflag, size = 0x8, scoped, tag = 'scoped memory for tpu_custom_call.1']
    #allocation7 [shape = 'u8[16384]{0}', space=vmem, size = 0x4000, scoped, tag = 'input window, operand 2']
    #allocation8 [shape = 's32[2]{0}', space=sflag, size = 0x8, scoped, tag = 'scoped memory for tpu_custom_call.1']
    #allocation9 [shape = 'u8[294912]{0}', space=vmem, size = 0x48000, scoped, tag = 'input window, operand 3, single buffered']
    #allocation10 [shape = 'u8[8192]{0}', space=vmem, size = 0x2000, scoped, tag = 'input window, operand 4, single buffered']
    #allocation11 [shape = 's32[1]{0}', space=sflag, size = 0x4, scoped, tag = 'scoped memory for tpu_custom_call.1']
    #allocation12 [shape = 'u8[16384]{0}', space=vmem, size = 0x4000, scoped, tag = 'output window, operand 0']
    #allocation13 [shape = 'u8[8192]{0}', space=vmem, size = 0x2000, scoped, tag = 'output window, operand 1']
    #allocation14 [shape = 's32[2]{0}', space=sflag, size = 0x8, scoped, tag = 'scoped memory for tpu_custom_call.1']
    #allocation15 [shape = 'u8[8192]{0}', space=vmem, size = 0x2000, scoped, tag = 'output window, operand 2']
    %17 = vsyncpa [#allocation5], 0
    %s18 = scalar_lea.sflag [#allocation5], 1
    %19 = vsyncpa %s18, 0
    %20 = vsyncpa [#allocation8], 0
    %s21 = scalar_lea.sflag [#allocation8], 1
    %22 = vsyncpa %s21, 0
    %23 = vsyncpa [#allocation11], 0
    %24 = vsyncpa [#allocation6], 0
    %s25 = scalar_lea.sflag [#allocation6], 1
    %26 = vsyncpa %s25, 0
    %27 = vsyncpa [#allocation14], 0
    %s28 = scalar_lea.sflag [#allocation14], 1
    %29 = vsyncpa %s28, 0
    loop: start=0, step=1, limit=4
    $region2: #{tpu_custom_call.1} parent=1 // loop_pre_header
      _
    $region3: #{tpu_custom_call.1} parent=1 // loop_header
      %s31 = sphi 0, %s35
      %p32 = scmp.ge.s32.totalorder %s31, 4
      %s41 = sphi 0, %s43
      %s44 = sphi 0, %s41
      %s45 = sphi 0, %s44
      %s61 = sphi 0, %s45
      %s67 = sphi 0, %s69
      %s70 = sphi 0, %s67
      %s71 = sphi 0, %s70
      %s87 = sphi 0, %s71
      %s91 = sphi 0, %s91
      %s93 = sphi 0, %s91
      %s94 = sphi 0, %s93
      %s108 = sphi 0, %s94
      %s112 = sphi 0, %s112
      %s114 = sphi 0, %s112
      %s115 = sphi 0, %s114
      %s129 = sphi 0, %s115
      %s135 = sphi 0, %s137
      %s138 = sphi 0, %s135
      %s139 = sphi 0, %s138
      %s155 = sphi 0, %s139
      %s161 = sphi 0, %s163
      %s164 = sphi 0, %s161
      %s165 = sphi 0, %s164
      %s181 = sphi 0, %s165
      %s187 = sphi 0, %s189
      %s190 = sphi 0, %s187
      %s191 = sphi 0, %s190
      %s207 = sphi 0, %s191
    $region4: #{tpu_custom_call.1} parent=1 // loop_header_branch
      %34 = sbr.rel (%p32) target = $region8
    $region5: #{tpu_custom_call.1} parent=1 // loop_body
      %s36 = ssub.s32 %s31, 1
      %s37 = ssub.s32 %s31, 2
      %s38 = sadd.s32 %s31, 1
      %s39 = ssub.s32 %s31, %s38
      %p40 = scmp.eq.s32.totalorder %s39, 0
      %s42 = sadd.s32 %s41, 1
      %s43 = scalar_select %p40, %s41, %s42
      %p46 = pneg %p40
      %p47 = scmp.eq.s32.totalorder %s31, 1
      %p48 = por %p46, %p47
      %p49 = scmp.ne.s32.totalorder %s41, %s44
      %p50 = scmp.eq.s32.totalorder %s31, 0
      %p51 = por %p49, %p50
      %p52 = scmp.ne.s32.totalorder %s41, %s44
      %p53 = scmp.eq.s32.totalorder %s36, 1
      %p54 = por %p52, %p53
      %p55 = scmp.ne.s32.totalorder %s44, %s45
      %p56 = scmp.eq.s32.totalorder %s36, 0
      %p57 = por %p55, %p56
      %p58 = scmp.ne.s32.totalorder %s44, %s45
      %p59 = scmp.eq.s32.totalorder %s37, 1
      %p60 = por %p58, %p59
      %p62 = scmp.ne.s32.totalorder %s45, %s61
      %p63 = scmp.eq.s32.totalorder %s37, 0
      %p64 = por %p62, %p63
      %s65 = ssub.s32 %s31, %s38
      %p66 = scmp.eq.s32.totalorder %s65, 0
      %s68 = sadd.s32 %s67, 1
      %s69 = scalar_select %p66, %s67, %s68
      %p72 = pneg %p66
      %p73 = scmp.eq.s32.totalorder %s31, 1
      %p74 = por %p72, %p73
      %p75 = scmp.ne.s32.totalorder %s67, %s70
      %p76 = scmp.eq.s32.totalorder %s31, 0
      %p77 = por %p75, %p76
      %p78 = scmp.ne.s32.totalorder %s67, %s70
      %p79 = scmp.eq.s32.totalorder %s36, 1
      %p80 = por %p78, %p79
      %p81 = scmp.ne.s32.totalorder %s70, %s71
      %p82 = scmp.eq.s32.totalorder %s36, 0
      %p83 = por %p81, %p82
      %p84 = scmp.ne.s32.totalorder %s70, %s71
      %p85 = scmp.eq.s32.totalorder %s37, 1
      %p86 = por %p84, %p85
      %p88 = scmp.ne.s32.totalorder %s71, %s87
      %p89 = scmp.eq.s32.totalorder %s37, 0
      %p90 = por %p88, %p89
      %s92 = sadd.s32 %s91, 1
      %p95 = scmp.eq.s32.totalorder %s31, 1
      %p96 = scmp.ne.s32.totalorder %s91, %s93
      %p97 = scmp.eq.s32.totalorder %s31, 0
      %p98 = por %p96, %p97
      %p99 = scmp.ne.s32.totalorder %s91, %s93
      %p100 = scmp.eq.s32.totalorder %s36, 1
      %p101 = por %p99, %p100
      %p102 = scmp.ne.s32.totalorder %s93, %s94
      %p103 = scmp.eq.s32.totalorder %s36, 0
      %p104 = por %p102, %p103
      %p105 = scmp.ne.s32.totalorder %s93, %s94
      %p106 = scmp.eq.s32.totalorder %s37, 1
      %p107 = por %p105, %p106
      %p109 = scmp.ne.s32.totalorder %s94, %s108
      %p110 = scmp.eq.s32.totalorder %s37, 0
      %p111 = por %p109, %p110
      %s113 = sadd.s32 %s112, 1
      %p116 = scmp.eq.s32.totalorder %s31, 1
      %p117 = scmp.ne.s32.totalorder %s112, %s114
      %p118 = scmp.eq.s32.totalorder %s31, 0
      %p119 = por %p117, %p118
      %p120 = scmp.ne.s32.totalorder %s112, %s114
      %p121 = scmp.eq.s32.totalorder %s36, 1
      %p122 = por %p120, %p121
      %p123 = scmp.ne.s32.totalorder %s114, %s115
      %p124 = scmp.eq.s32.totalorder %s36, 0
      %p125 = por %p123, %p124
      %p126 = scmp.ne.s32.totalorder %s114, %s115
      %p127 = scmp.eq.s32.totalorder %s37, 1
      %p128 = por %p126, %p127
      %p130 = scmp.ne.s32.totalorder %s115, %s129
      %p131 = scmp.eq.s32.totalorder %s37, 0
      %p132 = por %p130, %p131
      %s133 = ssub.s32 %s31, %s38
      %p134 = scmp.eq.s32.totalorder %s133, 0
      %s136 = sadd.s32 %s135, 1
      %s137 = scalar_select %p134, %s135, %s136
      %p140 = pneg %p134
      %p141 = scmp.eq.s32.totalorder %s31, 1
      %p142 = por %p140, %p141
      %p143 = scmp.ne.s32.totalorder %s135, %s138
      %p144 = scmp.eq.s32.totalorder %s31, 0
      %p145 = por %p143, %p144
      %p146 = scmp.ne.s32.totalorder %s135, %s138
      %p147 = scmp.eq.s32.totalorder %s36, 1
      %p148 = por %p146, %p147
      %p149 = scmp.ne.s32.totalorder %s138, %s139
      %p150 = scmp.eq.s32.totalorder %s36, 0
      %p151 = por %p149, %p150
      %p152 = scmp.ne.s32.totalorder %s138, %s139
      %p153 = scmp.eq.s32.totalorder %s37, 1
      %p154 = por %p152, %p153
      %p156 = scmp.ne.s32.totalorder %s139, %s155
      %p157 = scmp.eq.s32.totalorder %s37, 0
      %p158 = por %p156, %p157
      %s159 = ssub.s32 %s31, %s38
      %p160 = scmp.eq.s32.totalorder %s159, 0
      %s162 = sadd.s32 %s161, 1
      %s163 = scalar_select %p160, %s161, %s162
      %p166 = pneg %p160
      %p167 = scmp.eq.s32.totalorder %s31, 1
      %p168 = por %p166, %p167
      %p169 = scmp.ne.s32.totalorder %s161, %s164
      %p170 = scmp.eq.s32.totalorder %s31, 0
      %p171 = por %p169, %p170
      %p172 = scmp.ne.s32.totalorder %s161, %s164
      %p173 = scmp.eq.s32.totalorder %s36, 1
      %p174 = por %p172, %p173
      %p175 = scmp.ne.s32.totalorder %s164, %s165
      %p176 = scmp.eq.s32.totalorder %s36, 0
      %p177 = por %p175, %p176
      %p178 = scmp.ne.s32.totalorder %s164, %s165
      %p179 = scmp.eq.s32.totalorder %s37, 1
      %p180 = por %p178, %p179
      %p182 = scmp.ne.s32.totalorder %s165, %s181
      %p183 = scmp.eq.s32.totalorder %s37, 0
      %p184 = por %p182, %p183
      %s185 = ssub.s32 %s31, %s38
      %p186 = scmp.eq.s32.totalorder %s185, 0
      %s188 = sadd.s32 %s187, 1
      %s189 = scalar_select %p186, %s187, %s188
      %p192 = pneg %p186
      %p193 = scmp.eq.s32.totalorder %s31, 1
      %p194 = por %p192, %p193
      %p195 = scmp.ne.s32.totalorder %s187, %s190
      %p196 = scmp.eq.s32.totalorder %s31, 0
      %p197 = por %p195, %p196
      %p198 = scmp.ne.s32.totalorder %s187, %s190
      %p199 = scmp.eq.s32.totalorder %s36, 1
      %p200 = por %p198, %p199
      %p201 = scmp.ne.s32.totalorder %s190, %s191
      %p202 = scmp.eq.s32.totalorder %s36, 0
      %p203 = por %p201, %p202
      %p204 = scmp.ne.s32.totalorder %s190, %s191
      %p205 = scmp.eq.s32.totalorder %s37, 1
      %p206 = por %p204, %p205
      %p208 = scmp.ne.s32.totalorder %s191, %s207
      %p209 = scmp.eq.s32.totalorder %s37, 0
      %p210 = por %p208, %p209
      %p211 = scmp.le.s32.totalorder 1, %s31
      %p212 = scmp.lt.s32.totalorder %s31, 3
      %p213 = pnand %p211, %p212
      %p214 = pneg %p213
      // Predicated region
      $region9: #{tpu_custom_call.1} parent=5 // pred_check
        _
      $region10: #{tpu_custom_call.1} parent=5 // pred_check_branch
        %216 = sbr.rel (%p213) target = $region12
      $region11: #{tpu_custom_call.1} parent=5 // pred_region
        %s217 = ssub.s32 %s31, 1
        // Predicated region
        $region13: #{tpu_custom_call.1} parent=11 // pred_check
          %p218 = pneg %p104
        $region14: #{tpu_custom_call.1} parent=11 // pred_check_branch
          %220 = sbr.rel (%p218) target = $region16
        $region15: #{tpu_custom_call.1} parent=11 // pred_region
          %s222 = ssub.s32 9216, 9216
          %223 = vsyncadd [#allocation8], %s222
          %s224 = sshll.u32 [#allocation9], 4
          %s225 = int_to_ptr.vmem [resolvable:$true] %s224
          %230 = dma.hbm_to_vmem [thread:$0]  %s3, 9216, %s225, [#allocation8], 64, 64, 4
        $region16: #{tpu_custom_call.1} parent=11 // pred_fallthru
          _
        // Predicated region
        $region17: #{tpu_custom_call.1} parent=11 // pred_check
          %p231 = pneg %p125
        $region18: #{tpu_custom_call.1} parent=11 // pred_check_branch
          %233 = sbr.rel (%p231) target = $region20
        $region19: #{tpu_custom_call.1} parent=11 // pred_region
          %s235 = ssub.s32 256, 256
          %236 = vsyncadd [#allocation11], %s235
          %s237 = sshll.u32 [#allocation10], 4
          %s238 = int_to_ptr.vmem [resolvable:$true] %s237
          %243 = dma.hbm_to_vmem [thread:$0]  %s4, 256, %s238, [#allocation11], 128, 128, 8
        $region20: #{tpu_custom_call.1} parent=11 // pred_fallthru
          _
      $region12: #{tpu_custom_call.1} parent=5 // pred_fallthru
        _
      %p244 = scmp.lt.s32.totalorder %s31, 2
      // Predicated region
      $region21: #{tpu_custom_call.1} parent=5 // pred_check
        %p245 = pneg %p244
      $region22: #{tpu_custom_call.1} parent=5 // pred_check_branch
        %247 = sbr.rel (%p245) target = $region24
      $region23: #{tpu_custom_call.1} parent=5 // pred_region
        // Predicated region
        $region25: #{tpu_custom_call.1} parent=23 // pred_check
          %p248 = pneg %p51
        $region26: #{tpu_custom_call.1} parent=23 // pred_check_branch
          %250 = sbr.rel (%p248) target = $region28
        $region27: #{tpu_custom_call.1} parent=23 // pred_region
          %s251 = sand.u32 %s41, 1
          %s252 = scalar_lea.sflag [#allocation5], %s251
          %s253 = sand.u32 %s41, 1
          %s254 = smul.addr %s253, 16
          %s255 = scalar_lea.vmem [#allocation4], %s254
          %s256 = smul.u32 2, %s31
          %s258 = ssub.s32 256, 256
          %259 = vsyncadd %s252, %s258
          %s260 = smul.addr %s256, 128
          %s261 = scalar_lea.hbm %s1, %s260
          %s262 = sshll.u32 %s255, 4
          %s263 = int_to_ptr.vmem [resolvable:$true] %s262
          %268 = dma.hbm_to_vmem [thread:$0]  %s261, 256, %s263, %s252, 128, 128, 8
        $region28: #{tpu_custom_call.1} parent=23 // pred_fallthru
          _
        // Predicated region
        $region29: #{tpu_custom_call.1} parent=23 // pred_check
          %p269 = pneg %p77
        $region30: #{tpu_custom_call.1} parent=23 // pred_check_branch
          %271 = sbr.rel (%p269) target = $region32
        $region31: #{tpu_custom_call.1} parent=23 // pred_region
          %s272 = sand.u32 %s31, 1
          %s273 = scalar_lea.sflag [#allocation8], %s272
          %s274 = sand.u32 %s67, 1
          %s275 = smul.addr %s274, 16
          %s276 = scalar_lea.vmem [#allocation7], %s275
          %s277 = smul.u32 2, %s31
          %s279 = ssub.s32 256, 256
          %280 = vsyncadd %s273, %s279
          %s281 = smul.addr %s277, 128
          %s282 = scalar_lea.hbm %s2, %s281
          %s283 = sshll.u32 %s276, 4
          %s284 = int_to_ptr.vmem [resolvable:$true] %s283
          %289 = dma.hbm_to_vmem [thread:$0]  %s282, 256, %s284, %s273, 128, 128, 8
        $region32: #{tpu_custom_call.1} parent=23 // pred_fallthru
          _
      $region24: #{tpu_custom_call.1} parent=5 // pred_fallthru
        _
      %p290 = scmp.le.s32.totalorder 1, %s31
      %p291 = scmp.lt.s32.totalorder %s31, 3
      %p292 = pnand %p290, %p291
      %p293 = pneg %p292
      // Predicated region
      $region33: #{tpu_custom_call.1} parent=5 // pred_check
        _
      $region34: #{tpu_custom_call.1} parent=5 // pred_check_branch
        %295 = sbr.rel (%p292) target = $region36
      $region35: #{tpu_custom_call.1} parent=5 // pred_region
        %s296 = ssub.s32 %s31, 1
        %s297 = sand.u32 %s44, 1
        %s298 = scalar_lea.sflag [#allocation5], %s297
        %s299 = sand.u32 %s44, 1
        %s300 = smul.addr %s299, 16
        %s301 = scalar_lea.vmem [#allocation4], %s300
        // Predicated region
        $region37: #{tpu_custom_call.1} parent=35 // pred_check
          %p302 = pneg %p57
        $region38: #{tpu_custom_call.1} parent=35 // pred_check_branch
          %304 = sbr.rel (%p302) target = $region40
        $region39: #{tpu_custom_call.1} parent=35 // pred_region
          %305 = dma.done %s298, 256
        $region40: #{tpu_custom_call.1} parent=35 // pred_fallthru
          _
        %s306 = sand.u32 %s36, 1
        %s307 = scalar_lea.sflag [#allocation8], %s306
        %s308 = sand.u32 %s70, 1
        %s309 = smul.addr %s308, 16
        %s310 = scalar_lea.vmem [#allocation7], %s309
        // Predicated region
        $region41: #{tpu_custom_call.1} parent=35 // pred_check
          %p311 = pneg %p83
        $region42: #{tpu_custom_call.1} parent=35 // pred_check_branch
          %313 = sbr.rel (%p311) target = $region44
        $region43: #{tpu_custom_call.1} parent=35 // pred_region
          %314 = dma.done %s307, 256
        $region44: #{tpu_custom_call.1} parent=35 // pred_fallthru
          _
        // Predicated region
        $region45: #{tpu_custom_call.1} parent=35 // pred_check
          %p315 = pneg %p104
        $region46: #{tpu_custom_call.1} parent=35 // pred_check_branch
          %317 = sbr.rel (%p315) target = $region48
        $region47: #{tpu_custom_call.1} parent=35 // pred_region
          %318 = dma.done [#allocation8], 9216
        $region48: #{tpu_custom_call.1} parent=35 // pred_fallthru
          _
        // Predicated region
        $region49: #{tpu_custom_call.1} parent=35 // pred_check
          %p319 = pneg %p125
        $region50: #{tpu_custom_call.1} parent=35 // pred_check_branch
          %321 = sbr.rel (%p319) target = $region52
        $region51: #{tpu_custom_call.1} parent=35 // pred_region
          %322 = dma.done [#allocation11], 256
        $region52: #{tpu_custom_call.1} parent=35 // pred_fallthru
          _
        %s323 = sand.u32 %s44, 1
        %s324 = scalar_lea.sflag [#allocation5], %s323
        %s325 = sand.u32 %s44, 1
        %s326 = smul.addr %s325, 16
        %s327 = scalar_lea.vmem [#allocation4], %s326
        %p328 = pneg %p57
        %p329 = pneg %p54
        %s330 = sand.u32 %s36, 1
        %s331 = scalar_lea.sflag [#allocation8], %s330
        %s332 = sand.u32 %s70, 1
        %s333 = smul.addr %s332, 16
        %s334 = scalar_lea.vmem [#allocation7], %s333
        %p335 = pneg %p83
        %p336 = pneg %p80
        %p337 = pneg %p104
        %p338 = pneg %p101
        %p339 = pneg %p125
        %p340 = pneg %p122
        %p341 = pneg %p151
        %p342 = pneg %p148
        %s343 = sand.u32 %s138, 1
        %s344 = scalar_lea.sflag [#allocation6], %s343
        %s345 = sand.u32 %s138, 1
        %s346 = smul.addr %s345, 16
        %s347 = scalar_lea.vmem [#allocation12], %s346
        %p348 = pneg %p177
        %p349 = pneg %p174
        %s350 = sand.u32 %s36, 1
        %s351 = scalar_lea.sflag [#allocation14], %s350
        %s352 = sand.u32 %s164, 1
        %s353 = smul.addr %s352, 8
        %s354 = scalar_lea.vmem [#allocation13], %s353
        %p355 = pneg %p203
        %p356 = pneg %p200
        %s357 = sand.u32 %s36, 1
        %s358 = scalar_lea.sflag [#allocation14], %s357
        %s359 = sand.u32 %s190, 1
        %s360 = smul.addr %s359, 8
        %s361 = scalar_lea.vmem [#allocation15], %s360
        %s362 = smul.u32 2, %s36
        %s363 = smul.u32 2, %s36
        %s364 = smul.u32 2, %s36
        %s365 = smul.u32 2, %s36
        %s366 = smul.u32 2, %s36
        %s368 = sld [smem:[#allocation3 + %s36]]
        %v369 = vld [vmem:[%s301] sm:$0xff]
        %v370 = vld [vmem:[%s301 + $0x8] sm:$0xff]
        %v371 = vpack.c.bf16 %v370, %v369
        %v372 = vld [vmem:[%s310] sm:$0xff]
        %v373 = vld [vmem:[%s310 + $0x8] sm:$0xff]
        %v374 = vld [vmem:[#allocation10 + $0x6] sm:$0x1]
        %376 = vset.pattern.permute.xlu0 2
        %377 = vperm.xlu0 %376, %v372
        %v378 = vpop.permute.xlu0 %377
        %381 = vset.pattern.permute.xlu0 2
        %382 = vperm.xlu0 %381, %v373
        %v383 = vpop.permute.xlu0 %382
        %v385 = vlaneseq
        %v386 = vshrl.u32 %v385, 7
        %v387 = vsub.s32 0, %v386
        %v388 = vrot.slane %v374, %v387
        %v389 = vmul.f32 %v378, %v388
        %v390 = vmul.f32 %v383, %v388
        %v391 = vld [vmem:[#allocation10 + $0x7] sm:$0x1]
        %v392 = vlaneseq
        %v393 = vshrl.u32 %v392, 7
        %v394 = vsub.s32 0, %v393
        %v395 = vrot.slane %v391, %v394
        %v396 = vadd.f32 %v389, %v395
        %v397 = vadd.f32 %v390, %v395
        %v398 = vmul.f32 %v396, 0.5
        %v399 = vmul.f32 %v397, 0.5
        %v400 = vtanh.pop %v398
        %v401 = vtanh.pop %v399
        %v402 = vadd.f32 %v400, 1.0
        %v403 = vadd.f32 %v401, 1.0
        %v404 = vmul.f32 %v398, %v402
        %v405 = vmul.f32 %v399, %v403
        %v406 = vpack.c.bf16 %v405, %v404
        %s407 = scalar_lea.vmem [#allocation9], 384
        %v408 = vld [vmem:[%s407] sm:$0xf]
        %v409 = vld [vmem:[%s407 + $0x4] sm:$0xf]
        %v410 = vld [vmem:[%s407 + $0x8] sm:$0xf]
        %v411 = vld [vmem:[%s407 + $0xc] sm:$0xf]
        %v412 = vld [vmem:[%s407 + $0x10] sm:$0xf]
        %v413 = vld [vmem:[%s407 + $0x14] sm:$0xf]
        %v414 = vld [vmem:[%s407 + $0x18] sm:$0xf]
        %v415 = vld [vmem:[%s407 + $0x1c] sm:$0xf]
        %v416 = vld [vmem:[%s407 + $0x20] sm:$0xf]
        %v417 = vld [vmem:[%s407 + $0x24] sm:$0xf]
        %v418 = vld [vmem:[%s407 + $0x28] sm:$0xf]
        %v419 = vld [vmem:[%s407 + $0x2c] sm:$0xf]
        %v420 = vld [vmem:[%s407 + $0x30] sm:$0xf]
        %v421 = vld [vmem:[%s407 + $0x34] sm:$0xf]
        %v422 = vld [vmem:[%s407 + $0x38] sm:$0xf]
        %v423 = vld [vmem:[%s407 + $0x3c] sm:$0xf]
        %v424 = vld [vmem:[#allocation10 + $0x8] sm:$0x1]
        %v425 = vlaneseq
        %v426 = vshrl.u32 %v425, 7
        %v427 = vsub.s32 0, %v426
        %v428 = vrot.slane %v424, %v427
        %v445 = vunpack.c.l.b16 %v408
        %v446 = vunpack.c.l.b16 %v409
        %v447 = vunpack.c.l.b16 %v410
        %v448 = vunpack.c.l.b16 %v411
        %v449 = vunpack.c.l.b16 %v412
        %v450 = vunpack.c.l.b16 %v413
        %v451 = vunpack.c.l.b16 %v414
        %v452 = vunpack.c.l.b16 %v415
        %v453 = vunpack.c.l.b16 %v416
        %v454 = vunpack.c.l.b16 %v417
        %v455 = vunpack.c.l.b16 %v418
        %v456 = vunpack.c.l.b16 %v419
        %v457 = vunpack.c.l.b16 %v420
        %v458 = vunpack.c.l.b16 %v421
        %v459 = vunpack.c.l.b16 %v422
        %v460 = vunpack.c.l.b16 %v423
        %v461 = vpack.c.b16 %v446, %v445
        %v462 = vpack.c.b16 %v448, %v447
        %v463 = vpack.c.b16 %v450, %v449
        %v464 = vpack.c.b16 %v452, %v451
        %v465 = vpack.c.b16 %v454, %v453
        %v466 = vpack.c.b16 %v456, %v455
        %v467 = vpack.c.b16 %v458, %v457
        %v468 = vpack.c.b16 %v460, %v459
        %477 = vmatprep.subr.bf16.mxu0 0
        %478 = vmatpush1.bf16.msra.mxu0 %v468
        %479 = vmatprep.subr.bf16.mxu0 0
        %480 = vmatpush1.bf16.msra.mxu0 %v467
        %481 = vmatprep.subr.bf16.mxu0 0
        %482 = vmatpush1.bf16.msra.mxu0 %v466
        %483 = vmatprep.subr.bf16.mxu0 0
        %484 = vmatpush1.bf16.msra.mxu0 %v465
        %485 = vmatprep.subr.bf16.mxu0 0
        %486 = vmatpush1.bf16.msra.mxu0 %v464
        %487 = vmatprep.subr.bf16.mxu0 0
        %488 = vmatpush1.bf16.msra.mxu0 %v463
        %489 = vmatprep.subr.bf16.mxu0 0
        %490 = vmatpush1.bf16.msra.mxu0 %v462
        %491 = vmatprep.subr.bf16.mxu0 0
        %492 = vmatpush1.bf16.msra.mxu0 %v461
        %493 = vmatprep.subr.bf16.mxu0 0
        %494 = vmatpush2.bf16.msra.mxu0 0
        %495 = vmatprep.subr.bf16.mxu0 0
        %496 = vmatpush2.bf16.msra.mxu0 0
        %497 = vmatprep.subr.bf16.mxu0 0
        %498 = vmatpush2.bf16.msra.mxu0 0
        %499 = vmatprep.subr.bf16.mxu0 0
        %500 = vmatpush2.bf16.msra.mxu0 0
        %501 = vmatprep.subr.bf16.mxu0 0
        %502 = vmatpush2.bf16.msra.mxu0 0
        %503 = vmatprep.subr.bf16.mxu0 0
        %504 = vmatpush2.bf16.msra.mxu0 0
        %505 = vmatprep.subr.bf16.mxu0 0
        %506 = vmatpush2.bf16.msra.mxu0 0
        %507 = vmatprep.subr.bf16.mxu0 0
        %508 = vmatpush2.bf16.msra.mxu0 0
        %509 = vmatprep.mubr.bf16.mxu0 0
        %510 = vmatmul.mubr.bf16.gmra.mxu0 %v406
        %v511 = vpop.f32.mrf.mxu0
        %v512 = vadd.f32 %v428, %v511
        %v513 = vpop.f32.mrf.mxu0
        %v514 = vpop.f32.mrf.mxu0
        %v515 = vadd.f32 %v428, %v514
        %v516 = vpop.f32.mrf.mxu0
        %517 = vdwg.mxu0
        %518 = vst [vmem:[%s347] sm:$0xff] %v512
        %519 = vst [vmem:[%s347 + $0x8] sm:$0xff] %v515
        %s520 = sand.u32 %s368, 1
        %p521 = scmp.eq.s32.totalorder %s520, 1
        // Predicated region
        $region53: #{tpu_custom_call.1} parent=35 // pred_check
          %p522 = pneg %p521
        $region54: #{tpu_custom_call.1} parent=35 // pred_check_branch
          %524 = sbr.rel (%p522) target = $region56
        $region55: #{tpu_custom_call.1} parent=35 // pred_region
          %v525 = vld [vmem:[#allocation9] sm:$0xf]
          %v526 = vld [vmem:[#allocation9 + $0x4] sm:$0xf]
          %v527 = vld [vmem:[#allocation9 + $0x8] sm:$0xf]
          %v528 = vld [vmem:[#allocation9 + $0xc] sm:$0xf]
          %v529 = vld [vmem:[#allocation9 + $0x10] sm:$0xf]
          %v530 = vld [vmem:[#allocation9 + $0x14] sm:$0xf]
          %v531 = vld [vmem:[#allocation9 + $0x18] sm:$0xf]
          %v532 = vld [vmem:[#allocation9 + $0x1c] sm:$0xf]
          %v533 = vld [vmem:[#allocation9 + $0x20] sm:$0xf]
          %v534 = vld [vmem:[#allocation9 + $0x24] sm:$0xf]
          %v535 = vld [vmem:[#allocation9 + $0x28] sm:$0xf]
          %v536 = vld [vmem:[#allocation9 + $0x2c] sm:$0xf]
          %v537 = vld [vmem:[#allocation9 + $0x30] sm:$0xf]
          %v538 = vld [vmem:[#allocation9 + $0x34] sm:$0xf]
          %v539 = vld [vmem:[#allocation9 + $0x38] sm:$0xf]
          %v540 = vld [vmem:[#allocation9 + $0x3c] sm:$0xf]
          %v541 = vld [vmem:[#allocation10] sm:$0x1]
          %v542 = vlaneseq
          %v543 = vshrl.u32 %v542, 7
          %v544 = vsub.s32 0, %v543
          %v545 = vrot.slane %v541, %v544
          %v562 = vunpack.c.l.b16 %v525
          %v563 = vunpack.c.l.b16 %v526
          %v564 = vunpack.c.l.b16 %v527
          %v565 = vunpack.c.l.b16 %v528
          %v566 = vunpack.c.l.b16 %v529
          %v567 = vunpack.c.l.b16 %v530
          %v568 = vunpack.c.l.b16 %v531
          %v569 = vunpack.c.l.b16 %v532
          %v570 = vunpack.c.l.b16 %v533
          %v571 = vunpack.c.l.b16 %v534
          %v572 = vunpack.c.l.b16 %v535
          %v573 = vunpack.c.l.b16 %v536
          %v574 = vunpack.c.l.b16 %v537
          %v575 = vunpack.c.l.b16 %v538
          %v576 = vunpack.c.l.b16 %v539
          %v577 = vunpack.c.l.b16 %v540
          %v578 = vpack.c.b16 %v563, %v562
          %v579 = vpack.c.b16 %v565, %v564
          %v580 = vpack.c.b16 %v567, %v566
          %v581 = vpack.c.b16 %v569, %v568
          %v582 = vpack.c.b16 %v571, %v570
          %v583 = vpack.c.b16 %v573, %v572
          %v584 = vpack.c.b16 %v575, %v574
          %v585 = vpack.c.b16 %v577, %v576
          %594 = vmatprep.subr.bf16.mxu0 0
          %595 = vmatpush1.bf16.msra.mxu0 %v585
          %596 = vmatprep.subr.bf16.mxu0 0
          %597 = vmatpush1.bf16.msra.mxu0 %v584
          %598 = vmatprep.subr.bf16.mxu0 0
          %599 = vmatpush1.bf16.msra.mxu0 %v583
          %600 = vmatprep.subr.bf16.mxu0 0
          %601 = vmatpush1.bf16.msra.mxu0 %v582
          %602 = vmatprep.subr.bf16.mxu0 0
          %603 = vmatpush1.bf16.msra.mxu0 %v581
          %604 = vmatprep.subr.bf16.mxu0 0
          %605 = vmatpush1.bf16.msra.mxu0 %v580
          %606 = vmatprep.subr.bf16.mxu0 0
          %607 = vmatpush1.bf16.msra.mxu0 %v579
          %608 = vmatprep.subr.bf16.mxu0 0
          %609 = vmatpush1.bf16.msra.mxu0 %v578
          %610 = vmatprep.subr.bf16.mxu0 0
          %611 = vmatpush2.bf16.msra.mxu0 0
          %612 = vmatprep.subr.bf16.mxu0 0
          %613 = vmatpush2.bf16.msra.mxu0 0
          %614 = vmatprep.subr.bf16.mxu0 0
          %615 = vmatpush2.bf16.msra.mxu0 0
          %616 = vmatprep.subr.bf16.mxu0 0
          %617 = vmatpush2.bf16.msra.mxu0 0
          %618 = vmatprep.subr.bf16.mxu0 0
          %619 = vmatpush2.bf16.msra.mxu0 0
          %620 = vmatprep.subr.bf16.mxu0 0
          %621 = vmatpush2.bf16.msra.mxu0 0
          %622 = vmatprep.subr.bf16.mxu0 0
          %623 = vmatpush2.bf16.msra.mxu0 0
          %624 = vmatprep.subr.bf16.mxu0 0
          %625 = vmatpush2.bf16.msra.mxu0 0
          %626 = vmatprep.mubr.bf16.mxu0 0
          %627 = vmatmul.mubr.bf16.gmra.mxu0 %v371
          %v628 = vpop.f32.mrf.mxu0
          %v629 = vadd.f32 %v545, %v628
          %v630 = vpop.f32.mrf.mxu0
          %v631 = vpop.f32.mrf.mxu0
          %v632 = vadd.f32 %v545, %v631
          %v633 = vpop.f32.mrf.mxu0
          %634 = vdwg.mxu0
          %v635 = vmul.f32 %v629, 0.5
          %v636 = vmul.f32 %v632, 0.5
          %v637 = vtanh.pop %v635
          %v638 = vtanh.pop %v636
          %v639 = vadd.f32 %v637, 1.0
          %v640 = vadd.f32 %v638, 1.0
          %v641 = vmul.f32 %v635, %v639
          %v642 = vmul.f32 %v636, %v640
          %v643 = vpack.c.bf16 %v642, %v641
          %s644 = scalar_lea.vmem [#allocation9], 64
          %v645 = vld [vmem:[%s644] sm:$0xf]
          %v646 = vld [vmem:[%s644 + $0x4] sm:$0xf]
          %v647 = vld [vmem:[%s644 + $0x8] sm:$0xf]
          %v648 = vld [vmem:[%s644 + $0xc] sm:$0xf]
          %v649 = vld [vmem:[%s644 + $0x10] sm:$0xf]
          %v650 = vld [vmem:[%s644 + $0x14] sm:$0xf]
          %v651 = vld [vmem:[%s644 + $0x18] sm:$0xf]
          %v652 = vld [vmem:[%s644 + $0x1c] sm:$0xf]
          %v653 = vld [vmem:[%s644 + $0x20] sm:$0xf]
          %v654 = vld [vmem:[%s644 + $0x24] sm:$0xf]
          %v655 = vld [vmem:[%s644 + $0x28] sm:$0xf]
          %v656 = vld [vmem:[%s644 + $0x2c] sm:$0xf]
          %v657 = vld [vmem:[%s644 + $0x30] sm:$0xf]
          %v658 = vld [vmem:[%s644 + $0x34] sm:$0xf]
          %v659 = vld [vmem:[%s644 + $0x38] sm:$0xf]
          %v660 = vld [vmem:[%s644 + $0x3c] sm:$0xf]
          %v661 = vld [vmem:[#allocation10 + $0x1] sm:$0x1]
          %v662 = vlaneseq
          %v663 = vshrl.u32 %v662, 7
          %v664 = vsub.s32 0, %v663
          %v665 = vrot.slane %v661, %v664
          %v682 = vunpack.c.l.b16 %v645
          %v683 = vunpack.c.l.b16 %v646
          %v684 = vunpack.c.l.b16 %v647
          %v685 = vunpack.c.l.b16 %v648
          %v686 = vunpack.c.l.b16 %v649
          %v687 = vunpack.c.l.b16 %v650
          %v688 = vunpack.c.l.b16 %v651
          %v689 = vunpack.c.l.b16 %v652
          %v690 = vunpack.c.l.b16 %v653
          %v691 = vunpack.c.l.b16 %v654
          %v692 = vunpack.c.l.b16 %v655
          %v693 = vunpack.c.l.b16 %v656
          %v694 = vunpack.c.l.b16 %v657
          %v695 = vunpack.c.l.b16 %v658
          %v696 = vunpack.c.l.b16 %v659
          %v697 = vunpack.c.l.b16 %v660
          %v698 = vpack.c.b16 %v683, %v682
          %v699 = vpack.c.b16 %v685, %v684
          %v700 = vpack.c.b16 %v687, %v686
          %v701 = vpack.c.b16 %v689, %v688
          %v702 = vpack.c.b16 %v691, %v690
          %v703 = vpack.c.b16 %v693, %v692
          %v704 = vpack.c.b16 %v695, %v694
          %v705 = vpack.c.b16 %v697, %v696
          %714 = vmatprep.subr.bf16.mxu0 0
          %715 = vmatpush1.bf16.msra.mxu0 %v705
          %716 = vmatprep.subr.bf16.mxu0 0
          %717 = vmatpush1.bf16.msra.mxu0 %v704
          %718 = vmatprep.subr.bf16.mxu0 0
          %719 = vmatpush1.bf16.msra.mxu0 %v703
          %720 = vmatprep.subr.bf16.mxu0 0
          %721 = vmatpush1.bf16.msra.mxu0 %v702
          %722 = vmatprep.subr.bf16.mxu0 0
          %723 = vmatpush1.bf16.msra.mxu0 %v701
          %724 = vmatprep.subr.bf16.mxu0 0
          %725 = vmatpush1.bf16.msra.mxu0 %v700
          %726 = vmatprep.subr.bf16.mxu0 0
          %727 = vmatpush1.bf16.msra.mxu0 %v699
          %728 = vmatprep.subr.bf16.mxu0 0
          %729 = vmatpush1.bf16.msra.mxu0 %v698
          %730 = vmatprep.subr.bf16.mxu0 0
          %731 = vmatpush2.bf16.msra.mxu0 0
          %732 = vmatprep.subr.bf16.mxu0 0
          %733 = vmatpush2.bf16.msra.mxu0 0
          %734 = vmatprep.subr.bf16.mxu0 0
          %735 = vmatpush2.bf16.msra.mxu0 0
          %736 = vmatprep.subr.bf16.mxu0 0
          %737 = vmatpush2.bf16.msra.mxu0 0
          %738 = vmatprep.subr.bf16.mxu0 0
          %739 = vmatpush2.bf16.msra.mxu0 0
          %740 = vmatprep.subr.bf16.mxu0 0
          %741 = vmatpush2.bf16.msra.mxu0 0
          %742 = vmatprep.subr.bf16.mxu0 0
          %743 = vmatpush2.bf16.msra.mxu0 0
          %744 = vmatprep.subr.bf16.mxu0 0
          %745 = vmatpush2.bf16.msra.mxu0 0
          %746 = vmatprep.mubr.bf16.mxu0 0
          %747 = vmatmul.mubr.bf16.gmra.mxu0 %v643
          %v748 = vpop.f32.mrf.mxu0
          %v749 = vadd.f32 %v665, %v748
          %v750 = vpop.f32.mrf.mxu0
          %v751 = vpop.f32.mrf.mxu0
          %v752 = vadd.f32 %v665, %v751
          %v753 = vpop.f32.mrf.mxu0
          %754 = vdwg.mxu0
          %s755 = scalar_lea.vmem [#allocation9], 128
          %v756 = vld [vmem:[%s755] sm:$0xf]
          %v757 = vld [vmem:[%s755 + $0x4] sm:$0xf]
          %v758 = vld [vmem:[%s755 + $0x8] sm:$0xf]
          %v759 = vld [vmem:[%s755 + $0xc] sm:$0xf]
          %v760 = vld [vmem:[%s755 + $0x10] sm:$0xf]
          %v761 = vld [vmem:[%s755 + $0x14] sm:$0xf]
          %v762 = vld [vmem:[%s755 + $0x18] sm:$0xf]
          %v763 = vld [vmem:[%s755 + $0x1c] sm:$0xf]
          %v764 = vld [vmem:[%s755 + $0x20] sm:$0xf]
          %v765 = vld [vmem:[%s755 + $0x24] sm:$0xf]
          %v766 = vld [vmem:[%s755 + $0x28] sm:$0xf]
          %v767 = vld [vmem:[%s755 + $0x2c] sm:$0xf]
          %v768 = vld [vmem:[%s755 + $0x30] sm:$0xf]
          %v769 = vld [vmem:[%s755 + $0x34] sm:$0xf]
          %v770 = vld [vmem:[%s755 + $0x38] sm:$0xf]
          %v771 = vld [vmem:[%s755 + $0x3c] sm:$0xf]
          %v772 = vld [vmem:[#allocation10 + $0x2] sm:$0x1]
          %v773 = vlaneseq
          %v774 = vshrl.u32 %v773, 7
          %v775 = vsub.s32 0, %v774
          %v776 = vrot.slane %v772, %v775
          %v793 = vunpack.c.l.b16 %v756
          %v794 = vunpack.c.l.b16 %v757
          %v795 = vunpack.c.l.b16 %v758
          %v796 = vunpack.c.l.b16 %v759
          %v797 = vunpack.c.l.b16 %v760
          %v798 = vunpack.c.l.b16 %v761
          %v799 = vunpack.c.l.b16 %v762
          %v800 = vunpack.c.l.b16 %v763
          %v801 = vunpack.c.l.b16 %v764
          %v802 = vunpack.c.l.b16 %v765
          %v803 = vunpack.c.l.b16 %v766
          %v804 = vunpack.c.l.b16 %v767
          %v805 = vunpack.c.l.b16 %v768
          %v806 = vunpack.c.l.b16 %v769
          %v807 = vunpack.c.l.b16 %v770
          %v808 = vunpack.c.l.b16 %v771
          %v809 = vpack.c.b16 %v794, %v793
          %v810 = vpack.c.b16 %v796, %v795
          %v811 = vpack.c.b16 %v798, %v797
          %v812 = vpack.c.b16 %v800, %v799
          %v813 = vpack.c.b16 %v802, %v801
          %v814 = vpack.c.b16 %v804, %v803
          %v815 = vpack.c.b16 %v806, %v805
          %v816 = vpack.c.b16 %v808, %v807
          %825 = vmatprep.subr.bf16.mxu0 0
          %826 = vmatpush1.bf16.msra.mxu0 %v816
          %827 = vmatprep.subr.bf16.mxu0 0
          %828 = vmatpush1.bf16.msra.mxu0 %v815
          %829 = vmatprep.subr.bf16.mxu0 0
          %830 = vmatpush1.bf16.msra.mxu0 %v814
          %831 = vmatprep.subr.bf16.mxu0 0
          %832 = vmatpush1.bf16.msra.mxu0 %v813
          %833 = vmatprep.subr.bf16.mxu0 0
          %834 = vmatpush1.bf16.msra.mxu0 %v812
          %835 = vmatprep.subr.bf16.mxu0 0
          %836 = vmatpush1.bf16.msra.mxu0 %v811
          %837 = vmatprep.subr.bf16.mxu0 0
          %838 = vmatpush1.bf16.msra.mxu0 %v810
          %839 = vmatprep.subr.bf16.mxu0 0
          %840 = vmatpush1.bf16.msra.mxu0 %v809
          %841 = vmatprep.subr.bf16.mxu0 0
          %842 = vmatpush2.bf16.msra.mxu0 0
          %843 = vmatprep.subr.bf16.mxu0 0
          %844 = vmatpush2.bf16.msra.mxu0 0
          %845 = vmatprep.subr.bf16.mxu0 0
          %846 = vmatpush2.bf16.msra.mxu0 0
          %847 = vmatprep.subr.bf16.mxu0 0
          %848 = vmatpush2.bf16.msra.mxu0 0
          %849 = vmatprep.subr.bf16.mxu0 0
          %850 = vmatpush2.bf16.msra.mxu0 0
          %851 = vmatprep.subr.bf16.mxu0 0
          %852 = vmatpush2.bf16.msra.mxu0 0
          %853 = vmatprep.subr.bf16.mxu0 0
          %854 = vmatpush2.bf16.msra.mxu0 0
          %855 = vmatprep.subr.bf16.mxu0 0
          %856 = vmatpush2.bf16.msra.mxu0 0
          %857 = vmatprep.mubr.bf16.mxu0 0
          %858 = vmatmul.mubr.bf16.gmra.mxu0 %v371
          %v859 = vpop.f32.mrf.mxu0
          %v860 = vadd.f32 %v776, %v859
          %v861 = vpop.f32.mrf.mxu0
          %v862 = vpop.f32.mrf.mxu0
          %v863 = vadd.f32 %v776, %v862
          %v864 = vpop.f32.mrf.mxu0
          %865 = vdwg.mxu0
          %v866 = vmul.f32 %v860, 0.5
          %v867 = vmul.f32 %v863, 0.5
          %v868 = vtanh.pop %v866
          %v869 = vtanh.pop %v867
          %v870 = vadd.f32 %v868, 1.0
          %v871 = vadd.f32 %v869, 1.0
          %v872 = vmul.f32 %v866, %v870
          %v873 = vmul.f32 %v867, %v871
          %v874 = vpack.c.bf16 %v873, %v872
          %s875 = scalar_lea.vmem [#allocation9], 192
          %v876 = vld [vmem:[%s875] sm:$0xf]
          %v877 = vld [vmem:[%s875 + $0x4] sm:$0xf]
          %v878 = vld [vmem:[%s875 + $0x8] sm:$0xf]
          %v879 = vld [vmem:[%s875 + $0xc] sm:$0xf]
          %v880 = vld [vmem:[%s875 + $0x10] sm:$0xf]
          %v881 = vld [vmem:[%s875 + $0x14] sm:$0xf]
          %v882 = vld [vmem:[%s875 + $0x18] sm:$0xf]
          %v883 = vld [vmem:[%s875 + $0x1c] sm:$0xf]
          %v884 = vld [vmem:[%s875 + $0x20] sm:$0xf]
          %v885 = vld [vmem:[%s875 + $0x24] sm:$0xf]
          %v886 = vld [vmem:[%s875 + $0x28] sm:$0xf]
          %v887 = vld [vmem:[%s875 + $0x2c] sm:$0xf]
          %v888 = vld [vmem:[%s875 + $0x30] sm:$0xf]
          %v889 = vld [vmem:[%s875 + $0x34] sm:$0xf]
          %v890 = vld [vmem:[%s875 + $0x38] sm:$0xf]
          %v891 = vld [vmem:[%s875 + $0x3c] sm:$0xf]
          %v892 = vld [vmem:[#allocation10 + $0x3] sm:$0x1]
          %v893 = vlaneseq
          %v894 = vshrl.u32 %v893, 7
          %v895 = vsub.s32 0, %v894
          %v896 = vrot.slane %v892, %v895
          %v913 = vunpack.c.l.b16 %v876
          %v914 = vunpack.c.l.b16 %v877
          %v915 = vunpack.c.l.b16 %v878
          %v916 = vunpack.c.l.b16 %v879
          %v917 = vunpack.c.l.b16 %v880
          %v918 = vunpack.c.l.b16 %v881
          %v919 = vunpack.c.l.b16 %v882
          %v920 = vunpack.c.l.b16 %v883
          %v921 = vunpack.c.l.b16 %v884
          %v922 = vunpack.c.l.b16 %v885
          %v923 = vunpack.c.l.b16 %v886
          %v924 = vunpack.c.l.b16 %v887
          %v925 = vunpack.c.l.b16 %v888
          %v926 = vunpack.c.l.b16 %v889
          %v927 = vunpack.c.l.b16 %v890
          %v928 = vunpack.c.l.b16 %v891
          %v929 = vpack.c.b16 %v914, %v913
          %v930 = vpack.c.b16 %v916, %v915
          %v931 = vpack.c.b16 %v918, %v917
          %v932 = vpack.c.b16 %v920, %v919
          %v933 = vpack.c.b16 %v922, %v921
          %v934 = vpack.c.b16 %v924, %v923
          %v935 = vpack.c.b16 %v926, %v925
          %v936 = vpack.c.b16 %v928, %v927
          %945 = vmatprep.subr.bf16.mxu0 0
          %946 = vmatpush1.bf16.msra.mxu0 %v936
          %947 = vmatprep.subr.bf16.mxu0 0
          %948 = vmatpush1.bf16.msra.mxu0 %v935
          %949 = vmatprep.subr.bf16.mxu0 0
          %950 = vmatpush1.bf16.msra.mxu0 %v934
          %951 = vmatprep.subr.bf16.mxu0 0
          %952 = vmatpush1.bf16.msra.mxu0 %v933
          %953 = vmatprep.subr.bf16.mxu0 0
          %954 = vmatpush1.bf16.msra.mxu0 %v932
          %955 = vmatprep.subr.bf16.mxu0 0
          %956 = vmatpush1.bf16.msra.mxu0 %v931
          %957 = vmatprep.subr.bf16.mxu0 0
          %958 = vmatpush1.bf16.msra.mxu0 %v930
          %959 = vmatprep.subr.bf16.mxu0 0
          %960 = vmatpush1.bf16.msra.mxu0 %v929
          %961 = vmatprep.subr.bf16.mxu0 0
          %962 = vmatpush2.bf16.msra.mxu0 0
          %963 = vmatprep.subr.bf16.mxu0 0
          %964 = vmatpush2.bf16.msra.mxu0 0
          %965 = vmatprep.subr.bf16.mxu0 0
          %966 = vmatpush2.bf16.msra.mxu0 0
          %967 = vmatprep.subr.bf16.mxu0 0
          %968 = vmatpush2.bf16.msra.mxu0 0
          %969 = vmatprep.subr.bf16.mxu0 0
          %970 = vmatpush2.bf16.msra.mxu0 0
          %971 = vmatprep.subr.bf16.mxu0 0
          %972 = vmatpush2.bf16.msra.mxu0 0
          %973 = vmatprep.subr.bf16.mxu0 0
          %974 = vmatpush2.bf16.msra.mxu0 0
          %975 = vmatprep.subr.bf16.mxu0 0
          %976 = vmatpush2.bf16.msra.mxu0 0
          %977 = vmatprep.mubr.bf16.mxu0 0
          %978 = vmatmul.mubr.bf16.gmra.mxu0 %v874
          %v979 = vpop.f32.mrf.mxu0
          %v980 = vadd.f32 %v896, %v979
          %v981 = vpop.f32.mrf.mxu0
          %v982 = vpop.f32.mrf.mxu0
          %v983 = vadd.f32 %v896, %v982
          %v984 = vpop.f32.mrf.mxu0
          %985 = vdwg.mxu0
          %v986 = vld [vmem:[%s347] sm:$0xff]
          %v987 = vld [vmem:[%s347 + $0x8] sm:$0xff]
          %988 = vset.pattern.permute.xlu0 1
          %989 = vperm.xlu0 %988, %v372
          %v990 = vpop.permute.xlu0 %989
          %992 = vset.pattern.permute.xlu0 1
          %993 = vperm.xlu0 %992, %v373
          %v994 = vpop.permute.xlu0 %993
          %v996 = vmul.f32 %v990, %v749
          %v997 = vmul.f32 %v994, %v752
          %v998 = vsub.f32 1.0, %v372
          %v999 = vsub.f32 1.0, %v373
          %1001 = vset.pattern.permute.xlu0 1
          %1002 = vperm.xlu0 %1001, %v998
          %v1003 = vpop.permute.xlu0 %1002
          %1006 = vset.pattern.permute.xlu0 1
          %1007 = vperm.xlu0 %1006, %v999
          %v1008 = vpop.permute.xlu0 %1007
          %v1010 = vmul.f32 %v1003, %v980
          %v1011 = vmul.f32 %v1008, %v983
          %v1012 = vadd.f32 %v996, %v1010
          %v1013 = vadd.f32 %v997, %v1011
          %1014 = vset.pattern.permute.xlu0 0
          %1015 = vperm.xlu0 %1014, %v372
          %v1016 = vpop.permute.xlu0 %1015
          %1018 = vset.pattern.permute.xlu0 0
          %1019 = vperm.xlu0 %1018, %v373
          %v1020 = vpop.permute.xlu0 %1019
          %v1022 = vmul.f32 %v1016, %v1012
          %v1023 = vmul.f32 %v1020, %v1013
          %v1024 = vadd.f32 %v986, %v1022
          %v1025 = vadd.f32 %v987, %v1023
          %1026 = vst [vmem:[%s347] sm:$0xff] %v1024
          %1027 = vst [vmem:[%s347 + $0x8] sm:$0xff] %v1025
        $region56: #{tpu_custom_call.1} parent=35 // pred_fallthru
          _
        %s1028 = sand.u32 %s368, 2
        %p1029 = scmp.eq.s32.totalorder %s1028, 2
        // Predicated region
        $region57: #{tpu_custom_call.1} parent=35 // pred_check
          %p1030 = pneg %p1029
        $region58: #{tpu_custom_call.1} parent=35 // pred_check_branch
          %1032 = sbr.rel (%p1030) target = $region60
        $region59: #{tpu_custom_call.1} parent=35 // pred_region
          %s1033 = scalar_lea.vmem [#allocation9], 256
          %v1034 = vld [vmem:[%s1033] sm:$0xf]
          %v1035 = vld [vmem:[%s1033 + $0x4] sm:$0xf]
          %v1036 = vld [vmem:[%s1033 + $0x8] sm:$0xf]
          %v1037 = vld [vmem:[%s1033 + $0xc] sm:$0xf]
          %v1038 = vld [vmem:[%s1033 + $0x10] sm:$0xf]
          %v1039 = vld [vmem:[%s1033 + $0x14] sm:$0xf]
          %v1040 = vld [vmem:[%s1033 + $0x18] sm:$0xf]
          %v1041 = vld [vmem:[%s1033 + $0x1c] sm:$0xf]
          %v1042 = vld [vmem:[%s1033 + $0x20] sm:$0xf]
          %v1043 = vld [vmem:[%s1033 + $0x24] sm:$0xf]
          %v1044 = vld [vmem:[%s1033 + $0x28] sm:$0xf]
          %v1045 = vld [vmem:[%s1033 + $0x2c] sm:$0xf]
          %v1046 = vld [vmem:[%s1033 + $0x30] sm:$0xf]
          %v1047 = vld [vmem:[%s1033 + $0x34] sm:$0xf]
          %v1048 = vld [vmem:[%s1033 + $0x38] sm:$0xf]
          %v1049 = vld [vmem:[%s1033 + $0x3c] sm:$0xf]
          %v1050 = vld [vmem:[#allocation10 + $0x4] sm:$0x1]
          %v1051 = vlaneseq
          %v1052 = vshrl.u32 %v1051, 7
          %v1053 = vsub.s32 0, %v1052
          %v1054 = vrot.slane %v1050, %v1053
          %v1071 = vunpack.c.l.b16 %v1034
          %v1072 = vunpack.c.l.b16 %v1035
          %v1073 = vunpack.c.l.b16 %v1036
          %v1074 = vunpack.c.l.b16 %v1037
          %v1075 = vunpack.c.l.b16 %v1038
          %v1076 = vunpack.c.l.b16 %v1039
          %v1077 = vunpack.c.l.b16 %v1040
          %v1078 = vunpack.c.l.b16 %v1041
          %v1079 = vunpack.c.l.b16 %v1042
          %v1080 = vunpack.c.l.b16 %v1043
          %v1081 = vunpack.c.l.b16 %v1044
          %v1082 = vunpack.c.l.b16 %v1045
          %v1083 = vunpack.c.l.b16 %v1046
          %v1084 = vunpack.c.l.b16 %v1047
          %v1085 = vunpack.c.l.b16 %v1048
          %v1086 = vunpack.c.l.b16 %v1049
          %v1087 = vpack.c.b16 %v1072, %v1071
          %v1088 = vpack.c.b16 %v1074, %v1073
          %v1089 = vpack.c.b16 %v1076, %v1075
          %v1090 = vpack.c.b16 %v1078, %v1077
          %v1091 = vpack.c.b16 %v1080, %v1079
          %v1092 = vpack.c.b16 %v1082, %v1081
          %v1093 = vpack.c.b16 %v1084, %v1083
          %v1094 = vpack.c.b16 %v1086, %v1085
          %1103 = vmatprep.subr.bf16.mxu0 0
          %1104 = vmatpush1.bf16.msra.mxu0 %v1094
          %1105 = vmatprep.subr.bf16.mxu0 0
          %1106 = vmatpush1.bf16.msra.mxu0 %v1093
          %1107 = vmatprep.subr.bf16.mxu0 0
          %1108 = vmatpush1.bf16.msra.mxu0 %v1092
          %1109 = vmatprep.subr.bf16.mxu0 0
          %1110 = vmatpush1.bf16.msra.mxu0 %v1091
          %1111 = vmatprep.subr.bf16.mxu0 0
          %1112 = vmatpush1.bf16.msra.mxu0 %v1090
          %1113 = vmatprep.subr.bf16.mxu0 0
          %1114 = vmatpush1.bf16.msra.mxu0 %v1089
          %1115 = vmatprep.subr.bf16.mxu0 0
          %1116 = vmatpush1.bf16.msra.mxu0 %v1088
          %1117 = vmatprep.subr.bf16.mxu0 0
          %1118 = vmatpush1.bf16.msra.mxu0 %v1087
          %1119 = vmatprep.subr.bf16.mxu0 0
          %1120 = vmatpush2.bf16.msra.mxu0 0
          %1121 = vmatprep.subr.bf16.mxu0 0
          %1122 = vmatpush2.bf16.msra.mxu0 0
          %1123 = vmatprep.subr.bf16.mxu0 0
          %1124 = vmatpush2.bf16.msra.mxu0 0
          %1125 = vmatprep.subr.bf16.mxu0 0
          %1126 = vmatpush2.bf16.msra.mxu0 0
          %1127 = vmatprep.subr.bf16.mxu0 0
          %1128 = vmatpush2.bf16.msra.mxu0 0
          %1129 = vmatprep.subr.bf16.mxu0 0
          %1130 = vmatpush2.bf16.msra.mxu0 0
          %1131 = vmatprep.subr.bf16.mxu0 0
          %1132 = vmatpush2.bf16.msra.mxu0 0
          %1133 = vmatprep.subr.bf16.mxu0 0
          %1134 = vmatpush2.bf16.msra.mxu0 0
          %1135 = vmatprep.mubr.bf16.mxu0 0
          %1136 = vmatmul.mubr.bf16.gmra.mxu0 %v371
          %v1137 = vpop.f32.mrf.mxu0
          %v1138 = vadd.f32 %v1054, %v1137
          %v1139 = vpop.f32.mrf.mxu0
          %v1140 = vpop.f32.mrf.mxu0
          %v1141 = vadd.f32 %v1054, %v1140
          %v1142 = vpop.f32.mrf.mxu0
          %1143 = vdwg.mxu0
          %v1144 = vmul.f32 %v1138, 0.5
          %v1145 = vmul.f32 %v1141, 0.5
          %v1146 = vtanh.pop %v1144
          %v1147 = vtanh.pop %v1145
          %v1148 = vadd.f32 %v1146, 1.0
          %v1149 = vadd.f32 %v1147, 1.0
          %v1150 = vmul.f32 %v1144, %v1148
          %v1151 = vmul.f32 %v1145, %v1149
          %v1152 = vpack.c.bf16 %v1151, %v1150
          %s1153 = scalar_lea.vmem [#allocation9], 320
          %v1154 = vld [vmem:[%s1153] sm:$0xf]
          %v1155 = vld [vmem:[%s1153 + $0x4] sm:$0xf]
          %v1156 = vld [vmem:[%s1153 + $0x8] sm:$0xf]
          %v1157 = vld [vmem:[%s1153 + $0xc] sm:$0xf]
          %v1158 = vld [vmem:[%s1153 + $0x10] sm:$0xf]
          %v1159 = vld [vmem:[%s1153 + $0x14] sm:$0xf]
          %v1160 = vld [vmem:[%s1153 + $0x18] sm:$0xf]
          %v1161 = vld [vmem:[%s1153 + $0x1c] sm:$0xf]
          %v1162 = vld [vmem:[%s1153 + $0x20] sm:$0xf]
          %v1163 = vld [vmem:[%s1153 + $0x24] sm:$0xf]
          %v1164 = vld [vmem:[%s1153 + $0x28] sm:$0xf]
          %v1165 = vld [vmem:[%s1153 + $0x2c] sm:$0xf]
          %v1166 = vld [vmem:[%s1153 + $0x30] sm:$0xf]
          %v1167 = vld [vmem:[%s1153 + $0x34] sm:$0xf]
          %v1168 = vld [vmem:[%s1153 + $0x38] sm:$0xf]
          %v1169 = vld [vmem:[%s1153 + $0x3c] sm:$0xf]
          %v1170 = vld [vmem:[#allocation10 + $0x5] sm:$0x1]
          %v1171 = vlaneseq
          %v1172 = vshrl.u32 %v1171, 7
          %v1173 = vsub.s32 0, %v1172
          %v1174 = vrot.slane %v1170, %v1173
          %v1191 = vunpack.c.l.b16 %v1154
          %v1192 = vunpack.c.l.b16 %v1155
          %v1193 = vunpack.c.l.b16 %v1156
          %v1194 = vunpack.c.l.b16 %v1157
          %v1195 = vunpack.c.l.b16 %v1158
          %v1196 = vunpack.c.l.b16 %v1159
          %v1197 = vunpack.c.l.b16 %v1160
          %v1198 = vunpack.c.l.b16 %v1161
          %v1199 = vunpack.c.l.b16 %v1162
          %v1200 = vunpack.c.l.b16 %v1163
          %v1201 = vunpack.c.l.b16 %v1164
          %v1202 = vunpack.c.l.b16 %v1165
          %v1203 = vunpack.c.l.b16 %v1166
          %v1204 = vunpack.c.l.b16 %v1167
          %v1205 = vunpack.c.l.b16 %v1168
          %v1206 = vunpack.c.l.b16 %v1169
          %v1207 = vpack.c.b16 %v1192, %v1191
          %v1208 = vpack.c.b16 %v1194, %v1193
          %v1209 = vpack.c.b16 %v1196, %v1195
          %v1210 = vpack.c.b16 %v1198, %v1197
          %v1211 = vpack.c.b16 %v1200, %v1199
          %v1212 = vpack.c.b16 %v1202, %v1201
          %v1213 = vpack.c.b16 %v1204, %v1203
          %v1214 = vpack.c.b16 %v1206, %v1205
          %1223 = vmatprep.subr.bf16.mxu0 0
          %1224 = vmatpush1.bf16.msra.mxu0 %v1214
          %1225 = vmatprep.subr.bf16.mxu0 0
          %1226 = vmatpush1.bf16.msra.mxu0 %v1213
          %1227 = vmatprep.subr.bf16.mxu0 0
          %1228 = vmatpush1.bf16.msra.mxu0 %v1212
          %1229 = vmatprep.subr.bf16.mxu0 0
          %1230 = vmatpush1.bf16.msra.mxu0 %v1211
          %1231 = vmatprep.subr.bf16.mxu0 0
          %1232 = vmatpush1.bf16.msra.mxu0 %v1210
          %1233 = vmatprep.subr.bf16.mxu0 0
          %1234 = vmatpush1.bf16.msra.mxu0 %v1209
          %1235 = vmatprep.subr.bf16.mxu0 0
          %1236 = vmatpush1.bf16.msra.mxu0 %v1208
          %1237 = vmatprep.subr.bf16.mxu0 0
          %1238 = vmatpush1.bf16.msra.mxu0 %v1207
          %1239 = vmatprep.subr.bf16.mxu0 0
          %1240 = vmatpush2.bf16.msra.mxu0 0
          %1241 = vmatprep.subr.bf16.mxu0 0
          %1242 = vmatpush2.bf16.msra.mxu0 0
          %1243 = vmatprep.subr.bf16.mxu0 0
          %1244 = vmatpush2.bf16.msra.mxu0 0
          %1245 = vmatprep.subr.bf16.mxu0 0
          %1246 = vmatpush2.bf16.msra.mxu0 0
          %1247 = vmatprep.subr.bf16.mxu0 0
          %1248 = vmatpush2.bf16.msra.mxu0 0
          %1249 = vmatprep.subr.bf16.mxu0 0
          %1250 = vmatpush2.bf16.msra.mxu0 0
          %1251 = vmatprep.subr.bf16.mxu0 0
          %1252 = vmatpush2.bf16.msra.mxu0 0
          %1253 = vmatprep.subr.bf16.mxu0 0
          %1254 = vmatpush2.bf16.msra.mxu0 0
          %1255 = vmatprep.mubr.bf16.mxu0 0
          %1256 = vmatmul.mubr.bf16.gmra.mxu0 %v1152
          %v1257 = vpop.f32.mrf.mxu0
          %v1258 = vadd.f32 %v1174, %v1257
          %v1259 = vpop.f32.mrf.mxu0
          %v1260 = vpop.f32.mrf.mxu0
          %v1261 = vadd.f32 %v1174, %v1260
          %v1262 = vpop.f32.mrf.mxu0
          %1263 = vdwg.mxu0
          %v1264 = vld [vmem:[%s347] sm:$0xff]
          %v1265 = vld [vmem:[%s347 + $0x8] sm:$0xff]
          %v1266 = vsub.f32 1.0, %v372
          %v1267 = vsub.f32 1.0, %v373
          %1269 = vset.pattern.permute.xlu0 0
          %1270 = vperm.xlu0 %1269, %v1266
          %v1271 = vpop.permute.xlu0 %1270
          %1274 = vset.pattern.permute.xlu0 0
          %1275 = vperm.xlu0 %1274, %v1267
          %v1276 = vpop.permute.xlu0 %1275
          %v1278 = vmul.f32 %v1271, %v1258
          %v1279 = vmul.f32 %v1276, %v1261
          %v1280 = vadd.f32 %v1264, %v1278
          %v1281 = vadd.f32 %v1265, %v1279
          %1282 = vst [vmem:[%s347] sm:$0xff] %v1280
          %1283 = vst [vmem:[%s347 + $0x8] sm:$0xff] %v1281
        $region60: #{tpu_custom_call.1} parent=35 // pred_fallthru
          _
        %v1284 = vld [vmem:[%s347] sm:$0xff]
        %v1285 = vld [vmem:[%s347 + $0x8] sm:$0xff]
        %v1286 = vpack.c.bf16 %v1285, %v1284
        %s1287 = scalar_lea.vmem [#allocation9], 448
        %v1288 = vld [vmem:[%s1287] sm:$0xf]
        %v1289 = vld [vmem:[%s1287 + $0x4] sm:$0xf]
        %v1290 = vld [vmem:[%s1287 + $0x8] sm:$0xf]
        %v1291 = vld [vmem:[%s1287 + $0xc] sm:$0xf]
        %v1292 = vld [vmem:[%s1287 + $0x10] sm:$0xf]
        %v1293 = vld [vmem:[%s1287 + $0x14] sm:$0xf]
        %v1294 = vld [vmem:[%s1287 + $0x18] sm:$0xf]
        %v1295 = vld [vmem:[%s1287 + $0x1c] sm:$0xf]
        %v1296 = vld [vmem:[%s1287 + $0x20] sm:$0xf]
        %v1297 = vld [vmem:[%s1287 + $0x24] sm:$0xf]
        %v1298 = vld [vmem:[%s1287 + $0x28] sm:$0xf]
        %v1299 = vld [vmem:[%s1287 + $0x2c] sm:$0xf]
        %v1300 = vld [vmem:[%s1287 + $0x30] sm:$0xf]
        %v1301 = vld [vmem:[%s1287 + $0x34] sm:$0xf]
        %v1302 = vld [vmem:[%s1287 + $0x38] sm:$0xf]
        %v1303 = vld [vmem:[%s1287 + $0x3c] sm:$0xf]
        %v1320 = vunpack.c.l.b16 %v1288
        %v1321 = vunpack.c.l.b16 %v1289
        %v1322 = vunpack.c.l.b16 %v1290
        %v1323 = vunpack.c.l.b16 %v1291
        %v1324 = vunpack.c.l.b16 %v1292
        %v1325 = vunpack.c.l.b16 %v1293
        %v1326 = vunpack.c.l.b16 %v1294
        %v1327 = vunpack.c.l.b16 %v1295
        %v1328 = vunpack.c.l.b16 %v1296
        %v1329 = vunpack.c.l.b16 %v1297
        %v1330 = vunpack.c.l.b16 %v1298
        %v1331 = vunpack.c.l.b16 %v1299
        %v1332 = vunpack.c.l.b16 %v1300
        %v1333 = vunpack.c.l.b16 %v1301
        %v1334 = vunpack.c.l.b16 %v1302
        %v1335 = vunpack.c.l.b16 %v1303
        %v1336 = vpack.c.b16 %v1321, %v1320
        %v1337 = vpack.c.b16 %v1323, %v1322
        %v1338 = vpack.c.b16 %v1325, %v1324
        %v1339 = vpack.c.b16 %v1327, %v1326
        %v1340 = vpack.c.b16 %v1329, %v1328
        %v1341 = vpack.c.b16 %v1331, %v1330
        %v1342 = vpack.c.b16 %v1333, %v1332
        %v1343 = vpack.c.b16 %v1335, %v1334
        %1352 = vmatprep.subr.bf16.mxu0 0
        %1353 = vmatpush1.bf16.msra.mxu0 %v1343
        %1354 = vmatprep.subr.bf16.mxu0 0
        %1355 = vmatpush1.bf16.msra.mxu0 %v1342
        %1356 = vmatprep.subr.bf16.mxu0 0
        %1357 = vmatpush1.bf16.msra.mxu0 %v1341
        %1358 = vmatprep.subr.bf16.mxu0 0
        %1359 = vmatpush1.bf16.msra.mxu0 %v1340
        %1360 = vmatprep.subr.bf16.mxu0 0
        %1361 = vmatpush1.bf16.msra.mxu0 %v1339
        %1362 = vmatprep.subr.bf16.mxu0 0
        %1363 = vmatpush1.bf16.msra.mxu0 %v1338
        %1364 = vmatprep.subr.bf16.mxu0 0
        %1365 = vmatpush1.bf16.msra.mxu0 %v1337
        %1366 = vmatprep.subr.bf16.mxu0 0
        %1367 = vmatpush1.bf16.msra.mxu0 %v1336
        %1368 = vmatprep.subr.bf16.mxu0 0
        %1369 = vmatpush2.bf16.msra.mxu0 0
        %1370 = vmatprep.subr.bf16.mxu0 0
        %1371 = vmatpush2.bf16.msra.mxu0 0
        %1372 = vmatprep.subr.bf16.mxu0 0
        %1373 = vmatpush2.bf16.msra.mxu0 0
        %1374 = vmatprep.subr.bf16.mxu0 0
        %1375 = vmatpush2.bf16.msra.mxu0 0
        %1376 = vmatprep.subr.bf16.mxu0 0
        %1377 = vmatpush2.bf16.msra.mxu0 0
        %1378 = vmatprep.subr.bf16.mxu0 0
        %1379 = vmatpush2.bf16.msra.mxu0 0
        %1380 = vmatprep.subr.bf16.mxu0 0
        %1381 = vmatpush2.bf16.msra.mxu0 0
        %1382 = vmatprep.subr.bf16.mxu0 0
        %1383 = vmatpush2.bf16.msra.mxu0 0
        %1384 = vmatprep.mubr.bf16.mxu0 0
        %1385 = vmatmul.mubr.bf16.gmra.mxu0 %v1286
        %v1386 = vpop.f32.mrf.mxu0
        %v1387 = vadd.f32 0.0, %v1386
        %v1388 = vpop.f32.mrf.mxu0
        %v1389 = vpop.f32.mrf.mxu0
        %v1390 = vadd.f32 0.0, %v1389
        %v1391 = vpop.f32.mrf.mxu0
        %1392 = vdwg.mxu0
        %v1393 = vpack.c.bf16 %v1390, %v1387
        %v1395 = vunpack.c.l.b16 %v1393
        %v1396 = vunpack.c.h.b16 %v1393
        %v1397 = vpack.c.b16 %v1395, %v1395
        %v1398 = vpack.c.b16 %v1396, %v1396
        %1401 = vst [vmem:[%s354] sm:$0xf] %v1397
        %1402 = vst [vmem:[%s354 + $0x4] sm:$0xf] %v1398
        %s1403 = scalar_lea.vmem [#allocation9], 512
        %v1404 = vld [vmem:[%s1403] sm:$0xf]
        %v1405 = vld [vmem:[%s1403 + $0x4] sm:$0xf]
        %v1406 = vld [vmem:[%s1403 + $0x8] sm:$0xf]
        %v1407 = vld [vmem:[%s1403 + $0xc] sm:$0xf]
        %v1408 = vld [vmem:[%s1403 + $0x10] sm:$0xf]
        %v1409 = vld [vmem:[%s1403 + $0x14] sm:$0xf]
        %v1410 = vld [vmem:[%s1403 + $0x18] sm:$0xf]
        %v1411 = vld [vmem:[%s1403 + $0x1c] sm:$0xf]
        %v1412 = vld [vmem:[%s1403 + $0x20] sm:$0xf]
        %v1413 = vld [vmem:[%s1403 + $0x24] sm:$0xf]
        %v1414 = vld [vmem:[%s1403 + $0x28] sm:$0xf]
        %v1415 = vld [vmem:[%s1403 + $0x2c] sm:$0xf]
        %v1416 = vld [vmem:[%s1403 + $0x30] sm:$0xf]
        %v1417 = vld [vmem:[%s1403 + $0x34] sm:$0xf]
        %v1418 = vld [vmem:[%s1403 + $0x38] sm:$0xf]
        %v1419 = vld [vmem:[%s1403 + $0x3c] sm:$0xf]
        %v1420 = vld [vmem:[#allocation10 + $0x9] sm:$0x1]
        %v1421 = vlaneseq
        %v1422 = vshrl.u32 %v1421, 7
        %v1423 = vsub.s32 0, %v1422
        %v1424 = vrot.slane %v1420, %v1423
        %v1441 = vunpack.c.l.b16 %v1404
        %v1442 = vunpack.c.l.b16 %v1405
        %v1443 = vunpack.c.l.b16 %v1406
        %v1444 = vunpack.c.l.b16 %v1407
        %v1445 = vunpack.c.l.b16 %v1408
        %v1446 = vunpack.c.l.b16 %v1409
        %v1447 = vunpack.c.l.b16 %v1410
        %v1448 = vunpack.c.l.b16 %v1411
        %v1449 = vunpack.c.l.b16 %v1412
        %v1450 = vunpack.c.l.b16 %v1413
        %v1451 = vunpack.c.l.b16 %v1414
        %v1452 = vunpack.c.l.b16 %v1415
        %v1453 = vunpack.c.l.b16 %v1416
        %v1454 = vunpack.c.l.b16 %v1417
        %v1455 = vunpack.c.l.b16 %v1418
        %v1456 = vunpack.c.l.b16 %v1419
        %v1457 = vpack.c.b16 %v1442, %v1441
        %v1458 = vpack.c.b16 %v1444, %v1443
        %v1459 = vpack.c.b16 %v1446, %v1445
        %v1460 = vpack.c.b16 %v1448, %v1447
        %v1461 = vpack.c.b16 %v1450, %v1449
        %v1462 = vpack.c.b16 %v1452, %v1451
        %v1463 = vpack.c.b16 %v1454, %v1453
        %v1464 = vpack.c.b16 %v1456, %v1455
        %1473 = vmatprep.subr.bf16.mxu0 0
        %1474 = vmatpush1.bf16.msra.mxu0 %v1464
        %1475 = vmatprep.subr.bf16.mxu0 0
        %1476 = vmatpush1.bf16.msra.mxu0 %v1463
        %1477 = vmatprep.subr.bf16.mxu0 0
        %1478 = vmatpush1.bf16.msra.mxu0 %v1462
        %1479 = vmatprep.subr.bf16.mxu0 0
        %1480 = vmatpush1.bf16.msra.mxu0 %v1461
        %1481 = vmatprep.subr.bf16.mxu0 0
        %1482 = vmatpush1.bf16.msra.mxu0 %v1460
        %1483 = vmatprep.subr.bf16.mxu0 0
        %1484 = vmatpush1.bf16.msra.mxu0 %v1459
        %1485 = vmatprep.subr.bf16.mxu0 0
        %1486 = vmatpush1.bf16.msra.mxu0 %v1458
        %1487 = vmatprep.subr.bf16.mxu0 0
        %1488 = vmatpush1.bf16.msra.mxu0 %v1457
        %1489 = vmatprep.subr.bf16.mxu0 0
        %1490 = vmatpush2.bf16.msra.mxu0 0
        %1491 = vmatprep.subr.bf16.mxu0 0
        %1492 = vmatpush2.bf16.msra.mxu0 0
        %1493 = vmatprep.subr.bf16.mxu0 0
        %1494 = vmatpush2.bf16.msra.mxu0 0
        %1495 = vmatprep.subr.bf16.mxu0 0
        %1496 = vmatpush2.bf16.msra.mxu0 0
        %1497 = vmatprep.subr.bf16.mxu0 0
        %1498 = vmatpush2.bf16.msra.mxu0 0
        %1499 = vmatprep.subr.bf16.mxu0 0
        %1500 = vmatpush2.bf16.msra.mxu0 0
        %1501 = vmatprep.subr.bf16.mxu0 0
        %1502 = vmatpush2.bf16.msra.mxu0 0
        %1503 = vmatprep.subr.bf16.mxu0 0
        %1504 = vmatpush2.bf16.msra.mxu0 0
        %1505 = vmatprep.mubr.bf16.mxu0 0
        %1506 = vmatmul.mubr.bf16.gmra.mxu0 %v1286
        %v1507 = vpop.f32.mrf.mxu0
        %v1508 = vadd.f32 %v1424, %v1507
        %v1509 = vpop.f32.mrf.mxu0
        %v1510 = vpop.f32.mrf.mxu0
        %v1511 = vadd.f32 %v1424, %v1510
        %v1512 = vpop.f32.mrf.mxu0
        %1513 = vdwg.mxu0
        %v1514 = vpack.c.bf16 %v1511, %v1508
        %v1516 = vunpack.c.l.b16 %v1514
        %v1517 = vunpack.c.h.b16 %v1514
        %v1518 = vpack.c.b16 %v1516, %v1516
        %v1519 = vpack.c.b16 %v1517, %v1517
        %1522 = vst [vmem:[%s361] sm:$0xf] %v1518
        %1523 = vst [vmem:[%s361 + $0x4] sm:$0xf] %v1519
        %s1524 = sand.u32 %s138, 1
        %s1525 = scalar_lea.sflag [#allocation6], %s1524
        %s1526 = sand.u32 %s138, 1
        %s1527 = smul.addr %s1526, 16
        %s1528 = scalar_lea.vmem [#allocation12], %s1527
        %s1529 = sand.u32 %s36, 1
        %s1530 = scalar_lea.sflag [#allocation14], %s1529
        %s1531 = sand.u32 %s164, 1
        %s1532 = smul.addr %s1531, 8
        %s1533 = scalar_lea.vmem [#allocation13], %s1532
        %s1534 = sand.u32 %s36, 1
        %s1535 = scalar_lea.sflag [#allocation14], %s1534
        %s1536 = sand.u32 %s190, 1
        %s1537 = smul.addr %s1536, 8
        %s1538 = scalar_lea.vmem [#allocation15], %s1537
        // Predicated region
        $region61: #{tpu_custom_call.1} parent=35 // pred_check
          %p1539 = pneg %p148
        $region62: #{tpu_custom_call.1} parent=35 // pred_check_branch
          %1541 = sbr.rel (%p1539) target = $region64
        $region63: #{tpu_custom_call.1} parent=35 // pred_region
          %s1542 = smul.u32 2, %s36
          %s1544 = ssub.s32 256, 256
          %1545 = vsyncadd %s1525, %s1544
          %s1546 = smul.addr %s1542, 128
          %s1547 = scalar_lea.hbm %s5, %s1546
          %s1548 = sshll.u32 %s1528, 4
          %s1549 = int_to_ptr.vmem [resolvable:$true] %s1548
          %1554 = dma.vmem_to_hbm [thread:$0]  %s1549, 256, %s1547, %s1525, 128, 128, 8
        $region64: #{tpu_custom_call.1} parent=35 // pred_fallthru
          _
        // Predicated region
        $region65: #{tpu_custom_call.1} parent=35 // pred_check
          %p1555 = pneg %p174
        $region66: #{tpu_custom_call.1} parent=35 // pred_check_branch
          %1557 = sbr.rel (%p1555) target = $region68
        $region67: #{tpu_custom_call.1} parent=35 // pred_region
          %s1558 = smul.u32 2, %s36
          %s1560 = ssub.s32 128, 128
          %1561 = vsyncadd %s1530, %s1560
          %s1562 = smul.addr %s1558, 64
          %s1563 = scalar_lea.hbm %s6, %s1562
          %s1564 = sshll.u32 %s1533, 4
          %s1565 = int_to_ptr.vmem [resolvable:$true] %s1564
          %1570 = dma.vmem_to_hbm [thread:$0]  %s1565, 128, %s1563, %s1530, 64, 64, 4
        $region68: #{tpu_custom_call.1} parent=35 // pred_fallthru
          _
        // Predicated region
        $region69: #{tpu_custom_call.1} parent=35 // pred_check
          %p1571 = pneg %p200
        $region70: #{tpu_custom_call.1} parent=35 // pred_check_branch
          %1573 = sbr.rel (%p1571) target = $region72
        $region71: #{tpu_custom_call.1} parent=35 // pred_region
          %s1574 = smul.u32 2, %s36
          %s1576 = ssub.s32 128, 128
          %1577 = vsyncadd %s1535, %s1576
          %s1578 = smul.addr %s1574, 64
          %s1579 = scalar_lea.hbm %s7, %s1578
          %s1580 = sshll.u32 %s1538, 4
          %s1581 = int_to_ptr.vmem [resolvable:$true] %s1580
          %1586 = dma.vmem_to_hbm [thread:$0]  %s1581, 128, %s1579, %s1535, 64, 64, 4
        $region72: #{tpu_custom_call.1} parent=35 // pred_fallthru
          _
      $region36: #{tpu_custom_call.1} parent=5 // pred_fallthru
        _
      %p1587 = scmp.le.s32.totalorder 2, %s31
      // Predicated region
      $region73: #{tpu_custom_call.1} parent=5 // pred_check
        %p1588 = pneg %p1587
      $region74: #{tpu_custom_call.1} parent=5 // pred_check_branch
        %1590 = sbr.rel (%p1588) target = $region76
      $region75: #{tpu_custom_call.1} parent=5 // pred_region
        %s1591 = ssub.s32 %s31, 2
        // Predicated region
        $region77: #{tpu_custom_call.1} parent=75 // pred_check
          %p1592 = pneg %p154
        $region78: #{tpu_custom_call.1} parent=75 // pred_check_branch
          %1594 = sbr.rel (%p1592) target = $region80
        $region79: #{tpu_custom_call.1} parent=75 // pred_region
          %s1595 = sand.u32 %s139, 1
          %s1596 = scalar_lea.sflag [#allocation6], %s1595
          %s1597 = sand.u32 %s139, 1
          %s1598 = smul.addr %s1597, 16
          %s1599 = scalar_lea.vmem [#allocation12], %s1598
          %1600 = dma.done %s1596, 256
        $region80: #{tpu_custom_call.1} parent=75 // pred_fallthru
          _
        // Predicated region
        $region81: #{tpu_custom_call.1} parent=75 // pred_check
          %p1601 = pneg %p180
        $region82: #{tpu_custom_call.1} parent=75 // pred_check_branch
          %1603 = sbr.rel (%p1601) target = $region84
        $region83: #{tpu_custom_call.1} parent=75 // pred_region
          %s1604 = sand.u32 %s37, 1
          %s1605 = scalar_lea.sflag [#allocation14], %s1604
          %s1606 = sand.u32 %s165, 1
          %s1607 = smul.addr %s1606, 8
          %s1608 = scalar_lea.vmem [#allocation13], %s1607
          %1609 = dma.done %s1605, 128
        $region84: #{tpu_custom_call.1} parent=75 // pred_fallthru
          _
        // Predicated region
        $region85: #{tpu_custom_call.1} parent=75 // pred_check
          %p1610 = pneg %p206
        $region86: #{tpu_custom_call.1} parent=75 // pred_check_branch
          %1612 = sbr.rel (%p1610) target = $region88
        $region87: #{tpu_custom_call.1} parent=75 // pred_region
          %s1613 = sand.u32 %s37, 1
          %s1614 = scalar_lea.sflag [#allocation14], %s1613
          %s1615 = sand.u32 %s191, 1
          %s1616 = smul.addr %s1615, 8
          %s1617 = scalar_lea.vmem [#allocation15], %s1616
          %1618 = dma.done %s1614, 128
        $region88: #{tpu_custom_call.1} parent=75 // pred_fallthru
          _
      $region76: #{tpu_custom_call.1} parent=5 // pred_fallthru
        _
    $region6: #{tpu_custom_call.1} parent=1 // loop_footer
      %s35 = sadd.s32 1, %s31
    $region7: #{tpu_custom_call.1} parent=1 // loop_footer_branch
      %30 = sbr.rel target = $region3
    $region8: #{tpu_custom_call.1} parent=1 // loop_exit
      _
    %1619 = vsyncpa [#allocation5], 1
    %s1620 = scalar_lea.sflag [#allocation5], 1
    %1621 = vsyncpa %s1620, 1
    %1622 = vsyncpa [#allocation8], 1
    %s1623 = scalar_lea.sflag [#allocation8], 1
    %1624 = vsyncpa %s1623, 1
    %1625 = vsyncpa [#allocation11], 1
    %1626 = vsyncpa [#allocation6], 1
    %s1627 = scalar_lea.sflag [#allocation6], 1
    %1628 = vsyncpa %s1627, 1
    %1629 = vsyncpa [#allocation14], 1
    %s1630 = scalar_lea.sflag [#allocation14], 1
    %1631 = vsyncpa %s1630, 1

</llo_original>
